<compile_context>
chip_gen: v6e
topology: v6e:2x2x1
jax: 0.10.0
libtpu: 0.0.40
codegen_flags: <defaults>
</compile_context>

<pallas_src>
import jax
import jax.numpy as jnp
from jax import lax
from jax.experimental import pallas as pl
from jax.experimental.pallas import tpu as pltpu

BN_EPS = 1e-5


def _round_up(n, m):
    return ((n + m - 1) // m) * m


def generator_kernel(z_ref, c_ref,
                     w1z_ref, w1c_ref, b1_ref, g1_ref, be1_ref,
                     w2_ref, b2_ref, g2_ref, be2_ref,
                     w3_ref, b3_ref,
                     w4_ref, b4_ref,
                     o_ref):
    f32 = jnp.float32
    inv_b = f32(1.0 / z_ref.shape[0])

    def bn_fold(h, g, be):
        # One-pass batch statistics (independent XLU reductions), folded into a
        # single per-column scale/shift applied to the (B, H) tile.
        s = jnp.sum(h, axis=0, keepdims=True)
        ss = jnp.sum(h * h, axis=0, keepdims=True)
        mu = s * inv_b
        var = ss * inv_b - mu * mu
        scale = g * lax.rsqrt(var + BN_EPS)
        shift = be - mu * scale
        return h * scale + shift

    # ---- block 1: fused-concat Linear -> ReLU -> BatchNorm1d ----
    h = (jnp.dot(z_ref[...], w1z_ref[...], preferred_element_type=f32)
         + jnp.dot(c_ref[...], w1c_ref[...], preferred_element_type=f32)
         + b1_ref[...])
    h = jnp.maximum(h, 0.0)
    h = bn_fold(h, g1_ref[...], be1_ref[...])

    # ---- block 2: Linear -> ReLU -> BatchNorm1d ----
    h = jnp.dot(h.astype(w2_ref.dtype), w2_ref[...],
                preferred_element_type=f32) + b2_ref[...]
    h = jnp.maximum(h, 0.0)
    h = bn_fold(h, g2_ref[...], be2_ref[...])

    # ---- block 3: Linear -> ReLU -> Dropout(0.2) ----
    # w3/b3 are zero-padded to a lane-dense 128-wide slab; padded columns stay
    # exactly 0 through ReLU and contribute nothing to layer 4.
    h = jnp.dot(h.astype(w3_ref.dtype), w3_ref[...],
                preferred_element_type=f32) + b3_ref[...]
    h = jnp.maximum(h, 0.0)
    # TODO(synk): Dropout(0.2) applied with eval semantics (identity); torch's
    # train-mode RNG mask is not reproduced here.

    # ---- block 4: Linear -> Sigmoid (lane-dense padded output) ----
    y = jnp.dot(h.astype(w4_ref.dtype), w4_ref[...],
                preferred_element_type=f32) + b4_ref[...]
    # sigmoid: exp and reciprocal both routed to the EUP slot.
    o_ref[...] = pl.reciprocal(1.0 + jnp.exp(-y), approx=True).astype(o_ref.dtype)


def pack_params(params, latent_dim, compute_dtype=jnp.float32):
    """Split w1 for fused concat, pad layers 3/4 to lane-dense 128-wide slabs,
    optionally cast matmul weights to bf16 (biases/BN params stay f32)."""
    (w1, b1, g1, be1, w2, b2, g2, be2, w3, b3, w4, b4) = params
    w1z = w1[:latent_dim]
    w1c = w1[latent_dim:]

    h_half = w3.shape[1]                       # hidden // 2
    l3_pad = _round_up(max(h_half, 128), 128)  # lane-dense layer-3 width
    out_pad = 128                              # lane-dense output width

    w3p = jnp.pad(w3, ((0, 0), (0, l3_pad - h_half)))
    b3p = jnp.pad(b3, ((0, 0), (0, l3_pad - h_half)))
    w4p = jnp.pad(w4, ((0, l3_pad - w4.shape[0]), (0, out_pad - w4.shape[1])))
    b4p = jnp.pad(b4, ((0, 0), (0, out_pad - b4.shape[1])))

    cd = compute_dtype
    return (w1z.astype(cd), w1c.astype(cd), b1, g1, be1,
            w2.astype(cd), b2, g2, be2,
            w3p.astype(cd), b3p,
            w4p.astype(cd), b4p)


@jax.jit
def generator_forward(z, cond, packed):
    """z: (B, latent_dim), cond: (B, condition_dim) -> (B, 1) float32."""
    (w1z, w1c, b1, g1, be1, w2, b2, g2, be2, w3p, b3p, w4p, b4p) = packed
    B = z.shape[0]
    D_Z = z.shape[1]
    D_C = cond.shape[1]
    H = w2.shape[0]
    H3 = w3p.shape[1]
    HO = w4p.shape[1]

    # Whole batch is resident in VMEM (no grid).  At B=4096 the f32 activations
    # are ~2 MiB each, comfortably inside v7x's 32 MiB scoped VMEM.
    # TODO(synk): for B >> 4096 tile the batch with a parallel grid axis (uses
    # both v7x TensorCores) and switch BN to a two-pass / stats-accumulating
    # scheme, since BN couples every row of the batch.
    if B > 4096:
        raise ValueError("batch too large for single-tile kernel; tile the batch")

    cd = w1z.dtype
    zi = z.astype(cd)
    ci = cond.astype(cd)

    flops = int(2 * B * (D_Z * H + D_C * H + H * H + H * H3 + H3 * HO))
    transcendentals = int(2 * B * HO + 4 * H)          # exp + recip + rsqrt
    bytes_accessed = int(
        zi.size * zi.dtype.itemsize + ci.size * ci.dtype.itemsize
        + sum(p.size * p.dtype.itemsize for p in packed)
        + B * HO * 4)
    ce = pl.CostEstimate(flops=flops, transcendentals=transcendentals,
                         bytes_accessed=bytes_accessed)

    vmem = pl.BlockSpec(memory_space=pltpu.MemorySpace.VMEM)
    out = pl.pallas_call(
        generator_kernel,
        out_shape=jax.ShapeDtypeStruct((B, HO), jnp.float32),
        in_specs=[vmem] * 15,
        out_specs=vmem,
        cost_estimate=ce,
    )(zi, ci, w1z, w1c, b1, g1, be1, w2, b2, g2, be2, w3p, b3p, w4p, b4p)

    # Only column 0 is the real sigmoid output; the padded lanes are discarded.
    return out[:, :1]


def init_params(key, latent_dim, condition_dim, hidden_size=128):
    d_in = latent_dim + condition_dim
    h = hidden_size
    ks = jax.random.split(key, 8)
    scale = 0.1
    # Linear weights stored as (in, out); biases / BN params stored as (1, out).
    w1 = scale * jax.random.normal(ks[0], (d_in, h), jnp.float32)
    b1 = scale * jax.random.normal(ks[1], (1, h), jnp.float32)
    g1 = 1.0 + 0.05 * jax.random.normal(ks[2], (1, h), jnp.float32)
    be1 = 0.05 * jax.random.normal(ks[3], (1, h), jnp.float32)
    w2 = scale * jax.random.normal(ks[4], (h, h), jnp.float32)
    b2 = scale * jax.random.normal(ks[5], (1, h), jnp.float32)
    g2 = 1.0 + 0.05 * jax.random.normal(ks[6], (1, h), jnp.float32)
    be2 = 0.05 * jax.random.normal(ks[7], (1, h), jnp.float32)
    ks2 = jax.random.split(ks[7], 4)
    w3 = scale * jax.random.normal(ks2[0], (h, h // 2), jnp.float32)
    b3 = scale * jax.random.normal(ks2[1], (1, h // 2), jnp.float32)
    w4 = scale * jax.random.normal(ks2[2], (h // 2, 1), jnp.float32)
    b4 = scale * jax.random.normal(ks2[3], (1, 1), jnp.float32)
    return (w1, b1, g1, be1, w2, b2, g2, be2, w3, b3, w4, b4)


def reference_forward(z, cond, params):
    """Pure-JAX f32 reference with torch-parity semantics (two-pass BN, exact
    sigmoid, dropout=identity), for verification."""
    (w1, b1, g1, be1, w2, b2, g2, be2, w3, b3, w4, b4) = params
    x = jnp.concatenate([z, cond], axis=1).astype(jnp.float32)

    def bn(h, g, be):
        mu = jnp.mean(h, axis=0, keepdims=True)
        var = jnp.mean((h - mu) ** 2, axis=0, keepdims=True)
        return (h - mu) / jnp.sqrt(var + BN_EPS) * g + be

    h = jnp.maximum(x @ w1 + b1, 0.0)
    h = bn(h, g1, be1)
    h = jnp.maximum(h @ w2 + b2, 0.0)
    h = bn(h, g2, be2)
    h = jnp.maximum(h @ w3 + b3, 0.0)   # dropout = identity (eval)
    y = h @ w4 + b4
    return jax.nn.sigmoid(y)


if __name__ == "__main__":
    # Batch of 128 rows so the MXU systolic array is actually fed (the review's
    # main point); feature dims match the module (latent=16, cond=8, hidden=128).
    B, LATENT, COND, HIDDEN = 128, 16, 8, 128

    key = jax.random.PRNGKey(0)
    k_z, k_c, k_p = jax.random.split(key, 3)
    z = jax.random.normal(k_z, (B, LATENT), jnp.float32)
    cond = jax.random.normal(k_c, (B, COND), jnp.float32)
    params = init_params(k_p, LATENT, COND, HIDDEN)

    ref = jax.block_until_ready(reference_forward(z, cond, params))

    # f32 path (exact torch-f32 parity up to one-pass BN + EUP approx recip).
    packed_f32 = pack_params(params, LATENT, compute_dtype=jnp.float32)
    out = jax.block_until_ready(generator_forward(z, cond, packed_f32))
    assert out.shape == (B, 1) and out.dtype == jnp.float32
    assert jnp.allclose(out, ref, atol=5e-3, rtol=5e-3), (out, ref)

    # bf16-matmul path (v6e/v7x recommendation: bf16 operands, f32 accumulation
    # and f32 BN math); looser tolerance for bf16 rounding.
    packed_bf16 = pack_params(params, LATENT, compute_dtype=jnp.bfloat16)
    out_bf16 = jax.block_until_ready(generator_forward(z, cond, packed_bf16))
    assert out_bf16.shape == (B, 1)
    assert jnp.allclose(out_bf16, ref, atol=5e-2, rtol=5e-2), (out_bf16, ref)

    print("KERNEL_OK")
</pallas_src>

<mosaic_0001>
module attributes {stable_mosaic.version = 11 : i64} {
  func.func @generator_kernel(%arg0: memref<128x16xf32, #tpu.memory_space<vmem>>, %arg1: memref<128x8xf32, #tpu.memory_space<vmem>>, %arg2: memref<16x128xf32, #tpu.memory_space<vmem>>, %arg3: memref<8x128xf32, #tpu.memory_space<vmem>>, %arg4: memref<1x128xf32, #tpu.memory_space<vmem>>, %arg5: memref<1x128xf32, #tpu.memory_space<vmem>>, %arg6: memref<1x128xf32, #tpu.memory_space<vmem>>, %arg7: memref<128x128xf32, #tpu.memory_space<vmem>>, %arg8: memref<1x128xf32, #tpu.memory_space<vmem>>, %arg9: memref<1x128xf32, #tpu.memory_space<vmem>>, %arg10: memref<1x128xf32, #tpu.memory_space<vmem>>, %arg11: memref<128x128xf32, #tpu.memory_space<vmem>>, %arg12: memref<1x128xf32, #tpu.memory_space<vmem>>, %arg13: memref<128x128xf32, #tpu.memory_space<vmem>>, %arg14: memref<1x128xf32, #tpu.memory_space<vmem>>, %arg15: memref<128x128xf32, #tpu.memory_space<vmem>>) attributes {dimension_semantics = [], scalar_prefetch = 0 : i64, scratch_operands = 0 : i64, tpu.core_type = #tpu.core_type<tc>} {
    %c0 = arith.constant 0 : index
    %c0_0 = arith.constant 0 : index
    %0 = vector.load %arg0[%c0, %c0_0] : memref<128x16xf32, #tpu.memory_space<vmem>>, vector<128x16xf32>
    %c0_1 = arith.constant 0 : index
    %c0_2 = arith.constant 0 : index
    %1 = vector.load %arg2[%c0_1, %c0_2] : memref<16x128xf32, #tpu.memory_space<vmem>>, vector<16x128xf32>
    %cst = arith.constant dense<0.000000e+00> : vector<128x128xf32>
    %2 = tpu.matmul %0, %1, %cst {dimension_numbers = #tpu.dot_dimension_numbers<[1], [0], [0], [1], [0, 0, 1, 1], [], []>} : vector<128x16xf32>, vector<16x128xf32>, vector<128x128xf32> -> vector<128x128xf32>
    %c0_3 = arith.constant 0 : index
    %c0_4 = arith.constant 0 : index
    %3 = vector.load %arg1[%c0_3, %c0_4] : memref<128x8xf32, #tpu.memory_space<vmem>>, vector<128x8xf32>
    %c0_5 = arith.constant 0 : index
    %c0_6 = arith.constant 0 : index
    %4 = vector.load %arg3[%c0_5, %c0_6] : memref<8x128xf32, #tpu.memory_space<vmem>>, vector<8x128xf32>
    %cst_7 = arith.constant dense<0.000000e+00> : vector<128x128xf32>
    %5 = tpu.matmul %3, %4, %cst_7 {dimension_numbers = #tpu.dot_dimension_numbers<[1], [0], [0], [1], [0, 0, 1, 1], [], []>} : vector<128x8xf32>, vector<8x128xf32>, vector<128x128xf32> -> vector<128x128xf32>
    %6 = arith.addf %2, %5 : vector<128x128xf32>
    %c0_8 = arith.constant 0 : index
    %c0_9 = arith.constant 0 : index
    %7 = vector.load %arg4[%c0_8, %c0_9] : memref<1x128xf32, #tpu.memory_space<vmem>>, vector<1x128xf32>
    %8 = vector.broadcast %7 : vector<1x128xf32> to vector<128x128xf32>
    %9 = arith.addf %6, %8 : vector<128x128xf32>
    %cst_10 = arith.constant 0.000000e+00 : f32
    %10 = vector.broadcast %cst_10 : f32 to vector<128x128xf32>
    %11 = arith.maximumf %9, %10 : vector<128x128xf32>
    %c0_11 = arith.constant 0 : index
    %c0_12 = arith.constant 0 : index
    %12 = vector.load %arg5[%c0_11, %c0_12] : memref<1x128xf32, #tpu.memory_space<vmem>>, vector<1x128xf32>
    %c0_13 = arith.constant 0 : index
    %c0_14 = arith.constant 0 : index
    %13 = vector.load %arg6[%c0_13, %c0_14] : memref<1x128xf32, #tpu.memory_space<vmem>>, vector<1x128xf32>
    %cst_15 = arith.constant dense<0.000000e+00> : vector<128xf32>
    %14 = vector.multi_reduction <add>, %11, %cst_15 [0] : vector<128x128xf32> to vector<128xf32>
    %15 = vector.shape_cast %14 : vector<128xf32> to vector<1x128xf32>
    %16 = arith.mulf %11, %11 : vector<128x128xf32>
    %cst_16 = arith.constant dense<0.000000e+00> : vector<128xf32>
    %17 = vector.multi_reduction <add>, %16, %cst_16 [0] : vector<128x128xf32> to vector<128xf32>
    %18 = vector.shape_cast %17 : vector<128xf32> to vector<1x128xf32>
    %cst_17 = arith.constant 7.812500e-03 : f32
    %19 = vector.broadcast %cst_17 : f32 to vector<1x128xf32>
    %20 = arith.mulf %15, %19 : vector<1x128xf32>
    %cst_18 = arith.constant 7.812500e-03 : f32
    %21 = vector.broadcast %cst_18 : f32 to vector<1x128xf32>
    %22 = arith.mulf %18, %21 : vector<1x128xf32>
    %23 = arith.mulf %20, %20 : vector<1x128xf32>
    %24 = arith.subf %22, %23 : vector<1x128xf32>
    %cst_19 = arith.constant 9.99999974E-6 : f32
    %25 = vector.broadcast %cst_19 : f32 to vector<1x128xf32>
    %26 = arith.addf %24, %25 : vector<1x128xf32>
    %27 = math.rsqrt %26 : vector<1x128xf32>
    %28 = arith.mulf %12, %27 : vector<1x128xf32>
    %29 = arith.mulf %20, %28 : vector<1x128xf32>
    %30 = arith.subf %13, %29 : vector<1x128xf32>
    %31 = vector.broadcast %28 : vector<1x128xf32> to vector<128x128xf32>
    %32 = arith.mulf %11, %31 : vector<128x128xf32>
    %33 = vector.broadcast %30 : vector<1x128xf32> to vector<128x128xf32>
    %34 = arith.addf %32, %33 : vector<128x128xf32>
    %c0_20 = arith.constant 0 : index
    %c0_21 = arith.constant 0 : index
    %35 = vector.load %arg7[%c0_20, %c0_21] : memref<128x128xf32, #tpu.memory_space<vmem>>, vector<128x128xf32>
    %cst_22 = arith.constant dense<0.000000e+00> : vector<128x128xf32>
    %36 = tpu.matmul %34, %35, %cst_22 {dimension_numbers = #tpu.dot_dimension_numbers<[1], [0], [0], [1], [0, 0, 1, 1], [], []>} : vector<128x128xf32>, vector<128x128xf32>, vector<128x128xf32> -> vector<128x128xf32>
    %c0_23 = arith.constant 0 : index
    %c0_24 = arith.constant 0 : index
    %37 = vector.load %arg8[%c0_23, %c0_24] : memref<1x128xf32, #tpu.memory_space<vmem>>, vector<1x128xf32>
    %38 = vector.broadcast %37 : vector<1x128xf32> to vector<128x128xf32>
    %39 = arith.addf %36, %38 : vector<128x128xf32>
    %cst_25 = arith.constant 0.000000e+00 : f32
    %40 = vector.broadcast %cst_25 : f32 to vector<128x128xf32>
    %41 = arith.maximumf %39, %40 : vector<128x128xf32>
    %c0_26 = arith.constant 0 : index
    %c0_27 = arith.constant 0 : index
    %42 = vector.load %arg9[%c0_26, %c0_27] : memref<1x128xf32, #tpu.memory_space<vmem>>, vector<1x128xf32>
    %c0_28 = arith.constant 0 : index
    %c0_29 = arith.constant 0 : index
    %43 = vector.load %arg10[%c0_28, %c0_29] : memref<1x128xf32, #tpu.memory_space<vmem>>, vector<1x128xf32>
    %cst_30 = arith.constant dense<0.000000e+00> : vector<128xf32>
    %44 = vector.multi_reduction <add>, %41, %cst_30 [0] : vector<128x128xf32> to vector<128xf32>
    %45 = vector.shape_cast %44 : vector<128xf32> to vector<1x128xf32>
    %46 = arith.mulf %41, %41 : vector<128x128xf32>
    %cst_31 = arith.constant dense<0.000000e+00> : vector<128xf32>
    %47 = vector.multi_reduction <add>, %46, %cst_31 [0] : vector<128x128xf32> to vector<128xf32>
    %48 = vector.shape_cast %47 : vector<128xf32> to vector<1x128xf32>
    %cst_32 = arith.constant 7.812500e-03 : f32
    %49 = vector.broadcast %cst_32 : f32 to vector<1x128xf32>
    %50 = arith.mulf %45, %49 : vector<1x128xf32>
    %cst_33 = arith.constant 7.812500e-03 : f32
    %51 = vector.broadcast %cst_33 : f32 to vector<1x128xf32>
    %52 = arith.mulf %48, %51 : vector<1x128xf32>
    %53 = arith.mulf %50, %50 : vector<1x128xf32>
    %54 = arith.subf %52, %53 : vector<1x128xf32>
    %cst_34 = arith.constant 9.99999974E-6 : f32
    %55 = vector.broadcast %cst_34 : f32 to vector<1x128xf32>
    %56 = arith.addf %54, %55 : vector<1x128xf32>
    %57 = math.rsqrt %56 : vector<1x128xf32>
    %58 = arith.mulf %42, %57 : vector<1x128xf32>
    %59 = arith.mulf %50, %58 : vector<1x128xf32>
    %60 = arith.subf %43, %59 : vector<1x128xf32>
    %61 = vector.broadcast %58 : vector<1x128xf32> to vector<128x128xf32>
    %62 = arith.mulf %41, %61 : vector<128x128xf32>
    %63 = vector.broadcast %60 : vector<1x128xf32> to vector<128x128xf32>
    %64 = arith.addf %62, %63 : vector<128x128xf32>
    %c0_35 = arith.constant 0 : index
    %c0_36 = arith.constant 0 : index
    %65 = vector.load %arg11[%c0_35, %c0_36] : memref<128x128xf32, #tpu.memory_space<vmem>>, vector<128x128xf32>
    %cst_37 = arith.constant dense<0.000000e+00> : vector<128x128xf32>
    %66 = tpu.matmul %64, %65, %cst_37 {dimension_numbers = #tpu.dot_dimension_numbers<[1], [0], [0], [1], [0, 0, 1, 1], [], []>} : vector<128x128xf32>, vector<128x128xf32>, vector<128x128xf32> -> vector<128x128xf32>
    %c0_38 = arith.constant 0 : index
    %c0_39 = arith.constant 0 : index
    %67 = vector.load %arg12[%c0_38, %c0_39] : memref<1x128xf32, #tpu.memory_space<vmem>>, vector<1x128xf32>
    %68 = vector.broadcast %67 : vector<1x128xf32> to vector<128x128xf32>
    %69 = arith.addf %66, %68 : vector<128x128xf32>
    %cst_40 = arith.constant 0.000000e+00 : f32
    %70 = vector.broadcast %cst_40 : f32 to vector<128x128xf32>
    %71 = arith.maximumf %69, %70 : vector<128x128xf32>
    %c0_41 = arith.constant 0 : index
    %c0_42 = arith.constant 0 : index
    %72 = vector.load %arg13[%c0_41, %c0_42] : memref<128x128xf32, #tpu.memory_space<vmem>>, vector<128x128xf32>
    %cst_43 = arith.constant dense<0.000000e+00> : vector<128x128xf32>
    %73 = tpu.matmul %71, %72, %cst_43 {dimension_numbers = #tpu.dot_dimension_numbers<[1], [0], [0], [1], [0, 0, 1, 1], [], []>} : vector<128x128xf32>, vector<128x128xf32>, vector<128x128xf32> -> vector<128x128xf32>
    %c0_44 = arith.constant 0 : index
    %c0_45 = arith.constant 0 : index
    %74 = vector.load %arg14[%c0_44, %c0_45] : memref<1x128xf32, #tpu.memory_space<vmem>>, vector<1x128xf32>
    %75 = vector.broadcast %74 : vector<1x128xf32> to vector<128x128xf32>
    %76 = arith.addf %73, %75 : vector<128x128xf32>
    %cst_46 = arith.constant 0.000000e+00 : f32
    %77 = vector.broadcast %cst_46 : f32 to vector<128x128xf32>
    %78 = arith.subf %77, %76 : vector<128x128xf32>
    %79 = math.exp %78 : vector<128x128xf32>
    %cst_47 = arith.constant 1.000000e+00 : f32
    %80 = vector.broadcast %cst_47 : f32 to vector<128x128xf32>
    %81 = arith.addf %80, %79 : vector<128x128xf32>
    %82 = tpu.reciprocal %81 {approx = true} : vector<128x128xf32> -> vector<128x128xf32>
    %c0_48 = arith.constant 0 : index
    %c0_49 = arith.constant 0 : index
    %83 = vector.load %arg15[%c0_48, %c0_49] : memref<128x128xf32, #tpu.memory_space<vmem>>, vector<128x128xf32>
    tpu.vector_store %arg15[%c0_48, %c0_49], %82 {strides = array<i32>} : memref<128x128xf32, #tpu.memory_space<vmem>>, vector<128x128xf32>,
    return
  }
}

</mosaic_0001>

<llo_original>
// kernel: generator_forward.1
$region0: #{generator_forward.1}
  #allocation0 [shape = 'u32[]', space=smem, size = 0x4, offset = 0x4, fixed_abs, tag = 'smem constant byte address 0x4 - core index']
  #allocation1 [shape = 'u32[144,128]{1,0:T(1,128)}', space=vmem, size = 0x12000, scoped, tag = 'internal scratch']
  %s0 = inlined_call_operand.vmem [shape: f32[128,16], index: 0, kind: input, shape index: {}]
  %s1 = inlined_call_operand.vmem [shape: f32[128,8], index: 1, kind: input, shape index: {}]
  %s2 = inlined_call_operand.vmem [shape: f32[16,128], index: 2, kind: input, shape index: {}]
  %s3 = inlined_call_operand.hbm [shape: f32[8,128], index: 3, kind: input, shape index: {}]
  %s4 = inlined_call_operand.vmem [shape: f32[1,128], index: 4, kind: input, shape index: {}]
  %s5 = inlined_call_operand.vmem [shape: f32[1,128], index: 5, kind: input, shape index: {}]
  %s6 = inlined_call_operand.vmem [shape: f32[1,128], index: 6, kind: input, shape index: {}]
  %s7 = inlined_call_operand.vmem [shape: f32[128,128], index: 7, kind: input, shape index: {}]
  %s8 = inlined_call_operand.vmem [shape: f32[1,128], index: 8, kind: input, shape index: {}]
  %s9 = inlined_call_operand.vmem [shape: f32[1,128], index: 9, kind: input, shape index: {}]
  %s10 = inlined_call_operand.vmem [shape: f32[1,128], index: 10, kind: input, shape index: {}]
  %s11 = inlined_call_operand.vmem [shape: f32[128,128], index: 11, kind: input, shape index: {}]
  %s12 = inlined_call_operand.vmem [shape: f32[1,128], index: 12, kind: input, shape index: {}]
  %s13 = inlined_call_operand.hbm [shape: f32[128,128], index: 13, kind: input, shape index: {}]
  %s14 = inlined_call_operand.vmem [shape: f32[1,128], index: 14, kind: input, shape index: {}]
  %s15 = inlined_call_operand.vmem [shape: f32[128,128], index: 15, kind: output, shape index: {}]
  %s16 = sld [smem:[#allocation0]]
  $region78: #{generator_forward.1} parent=0
    _
  %s18 = ssub.s32 1, %s16
  %s19 = scalar_select 0, %s18, %s16
  $region1: #{generator_forward.1} parent=0
    #allocation2 [shape = 'u8[4096]{0}', space=vmem, size = 0x1000, scoped, tag = 'input window, operand 3, single buffered']
    #allocation3 [shape = 's32[1]{0}', space=sflag, size = 0x4, scoped, tag = 'scoped memory for generator_forward.1']
    #allocation4 [shape = 'u8[65536]{0}', space=vmem, size = 0x10000, scoped, tag = 'input window, operand 13, single buffered']
    #allocation5 [shape = 's32[1]{0}', space=sflag, size = 0x4, scoped, tag = 'scoped memory for generator_forward.1']
    %20 = vsyncpa [#allocation3], 0
    %21 = vsyncpa [#allocation5], 0
    // Predicated region
    $region2: #{generator_forward.1} parent=1 // pred_check
      _
    $region3: #{generator_forward.1} parent=1 // pred_check_branch
      %23 = sbr.rel (0) target = $region5
    $region4: #{generator_forward.1} parent=1 // pred_region
      _
    $region5: #{generator_forward.1} parent=1 // pred_fallthru
      _
    // Predicated region
    $region6: #{generator_forward.1} parent=1 // pred_check
      _
    $region7: #{generator_forward.1} parent=1 // pred_check_branch
      %25 = sbr.rel (0) target = $region9
    $region8: #{generator_forward.1} parent=1 // pred_region
      _
    $region9: #{generator_forward.1} parent=1 // pred_fallthru
      _
    // Predicated region
    $region10: #{generator_forward.1} parent=1 // pred_check
      _
    $region11: #{generator_forward.1} parent=1 // pred_check_branch
      %27 = sbr.rel (0) target = $region13
    $region12: #{generator_forward.1} parent=1 // pred_region
      _
    $region13: #{generator_forward.1} parent=1 // pred_fallthru
      _
    // Predicated region
    $region14: #{generator_forward.1} parent=1 // pred_check
      _
    $region15: #{generator_forward.1} parent=1 // pred_check_branch
      %29 = sbr.rel (0) target = $region17
    $region16: #{generator_forward.1} parent=1 // pred_region
      %s31 = ssub.s32 128, 128
      %32 = vsyncadd [#allocation3], %s31
      %s34 = sshll.u32 [#allocation2], 4
      %s35 = int_to_ptr.vmem [resolvable:$true] %s34
      %37 = dma.hbm_to_vmem [thread:$0]  %s3, 128, %s35, [#allocation3]
    $region17: #{generator_forward.1} parent=1 // pred_fallthru
      _
    // Predicated region
    $region18: #{generator_forward.1} parent=1 // pred_check
      _
    $region19: #{generator_forward.1} parent=1 // pred_check_branch
      %39 = sbr.rel (0) target = $region21
    $region20: #{generator_forward.1} parent=1 // pred_region
      _
    $region21: #{generator_forward.1} parent=1 // pred_fallthru
      _
    // Predicated region
    $region22: #{generator_forward.1} parent=1 // pred_check
      _
    $region23: #{generator_forward.1} parent=1 // pred_check_branch
      %41 = sbr.rel (0) target = $region25
    $region24: #{generator_forward.1} parent=1 // pred_region
      _
    $region25: #{generator_forward.1} parent=1 // pred_fallthru
      _
    // Predicated region
    $region26: #{generator_forward.1} parent=1 // pred_check
      _
    $region27: #{generator_forward.1} parent=1 // pred_check_branch
      %43 = sbr.rel (0) target = $region29
    $region28: #{generator_forward.1} parent=1 // pred_region
      _
    $region29: #{generator_forward.1} parent=1 // pred_fallthru
      _
    // Predicated region
    $region30: #{generator_forward.1} parent=1 // pred_check
      _
    $region31: #{generator_forward.1} parent=1 // pred_check_branch
      %45 = sbr.rel (0) target = $region33
    $region32: #{generator_forward.1} parent=1 // pred_region
      _
    $region33: #{generator_forward.1} parent=1 // pred_fallthru
      _
    // Predicated region
    $region34: #{generator_forward.1} parent=1 // pred_check
      _
    $region35: #{generator_forward.1} parent=1 // pred_check_branch
      %47 = sbr.rel (0) target = $region37
    $region36: #{generator_forward.1} parent=1 // pred_region
      _
    $region37: #{generator_forward.1} parent=1 // pred_fallthru
      _
    // Predicated region
    $region38: #{generator_forward.1} parent=1 // pred_check
      _
    $region39: #{generator_forward.1} parent=1 // pred_check_branch
      %49 = sbr.rel (0) target = $region41
    $region40: #{generator_forward.1} parent=1 // pred_region
      _
    $region41: #{generator_forward.1} parent=1 // pred_fallthru
      _
    // Predicated region
    $region42: #{generator_forward.1} parent=1 // pred_check
      _
    $region43: #{generator_forward.1} parent=1 // pred_check_branch
      %51 = sbr.rel (0) target = $region45
    $region44: #{generator_forward.1} parent=1 // pred_region
      _
    $region45: #{generator_forward.1} parent=1 // pred_fallthru
      _
    // Predicated region
    $region46: #{generator_forward.1} parent=1 // pred_check
      _
    $region47: #{generator_forward.1} parent=1 // pred_check_branch
      %53 = sbr.rel (0) target = $region49
    $region48: #{generator_forward.1} parent=1 // pred_region
      _
    $region49: #{generator_forward.1} parent=1 // pred_fallthru
      _
    // Predicated region
    $region50: #{generator_forward.1} parent=1 // pred_check
      _
    $region51: #{generator_forward.1} parent=1 // pred_check_branch
      %55 = sbr.rel (0) target = $region53
    $region52: #{generator_forward.1} parent=1 // pred_region
      _
    $region53: #{generator_forward.1} parent=1 // pred_fallthru
      _
    // Predicated region
    $region54: #{generator_forward.1} parent=1 // pred_check
      _
    $region55: #{generator_forward.1} parent=1 // pred_check_branch
      %57 = sbr.rel (0) target = $region57
    $region56: #{generator_forward.1} parent=1 // pred_region
      %s59 = ssub.s32 2048, 2048
      %60 = vsyncadd [#allocation5], %s59
      %s61 = sshll.u32 [#allocation4], 4
      %s62 = int_to_ptr.vmem [resolvable:$true] %s61
      %67 = dma.hbm_to_vmem [thread:$0]  %s13, 2048, %s62, [#allocation5], 128, 128, 8
    $region57: #{generator_forward.1} parent=1 // pred_fallthru
      _
    // Predicated region
    $region58: #{generator_forward.1} parent=1 // pred_check
      _
    $region59: #{generator_forward.1} parent=1 // pred_check_branch
      %69 = sbr.rel (0) target = $region61
    $region60: #{generator_forward.1} parent=1 // pred_region
      _
    $region61: #{generator_forward.1} parent=1 // pred_fallthru
      _
    // Predicated region
    $region62: #{generator_forward.1} parent=1 // pred_check
      _
    $region63: #{generator_forward.1} parent=1 // pred_check_branch
      %71 = sbr.rel (0) target = $region65
    $region64: #{generator_forward.1} parent=1 // pred_region
      %72 = dma.done [#allocation3], 128
    $region65: #{generator_forward.1} parent=1 // pred_fallthru
      _
    // Predicated region
    $region66: #{generator_forward.1} parent=1 // pred_check
      _
    $region67: #{generator_forward.1} parent=1 // pred_check_branch
      %74 = sbr.rel (0) target = $region69
    $region68: #{generator_forward.1} parent=1 // pred_region
      %75 = dma.done [#allocation5], 2048
    $region69: #{generator_forward.1} parent=1 // pred_fallthru
      _
    %v76 = vld [vmem:[%s0] sm:$0xff]
    %v77 = vld [vmem:[%s0 + $0x8] sm:$0xff]
    %v78 = vld [vmem:[%s0 + $0x10] sm:$0xff]
    %v79 = vld [vmem:[%s0 + $0x18] sm:$0xff]
    %v80 = vld [vmem:[%s0 + $0x20] sm:$0xff]
    %v81 = vld [vmem:[%s0 + $0x28] sm:$0xff]
    %v82 = vld [vmem:[%s0 + $0x30] sm:$0xff]
    %v83 = vld [vmem:[%s0 + $0x38] sm:$0xff]
    %v84 = vld [vmem:[%s0 + $0x40] sm:$0xff]
    %v85 = vld [vmem:[%s0 + $0x48] sm:$0xff]
    %v86 = vld [vmem:[%s0 + $0x50] sm:$0xff]
    %v87 = vld [vmem:[%s0 + $0x58] sm:$0xff]
    %v88 = vld [vmem:[%s0 + $0x60] sm:$0xff]
    %v89 = vld [vmem:[%s0 + $0x68] sm:$0xff]
    %v90 = vld [vmem:[%s0 + $0x70] sm:$0xff]
    %v91 = vld [vmem:[%s0 + $0x78] sm:$0xff]
    %v92 = vld [vmem:[%s2] sm:$0xff]
    %v93 = vld [vmem:[%s2 + $0x8] sm:$0xff]
    %v94 = vld [vmem:[%s1] sm:$0xff]
    %v95 = vld [vmem:[%s1 + $0x8] sm:$0xff]
    %v96 = vld [vmem:[%s1 + $0x10] sm:$0xff]
    %v97 = vld [vmem:[%s1 + $0x18] sm:$0xff]
    %v98 = vld [vmem:[%s1 + $0x20] sm:$0xff]
    %v99 = vld [vmem:[%s1 + $0x28] sm:$0xff]
    %v100 = vld [vmem:[%s1 + $0x30] sm:$0xff]
    %v101 = vld [vmem:[%s1 + $0x38] sm:$0xff]
    %v102 = vld [vmem:[%s1 + $0x40] sm:$0xff]
    %v103 = vld [vmem:[%s1 + $0x48] sm:$0xff]
    %v104 = vld [vmem:[%s1 + $0x50] sm:$0xff]
    %v105 = vld [vmem:[%s1 + $0x58] sm:$0xff]
    %v106 = vld [vmem:[%s1 + $0x60] sm:$0xff]
    %v107 = vld [vmem:[%s1 + $0x68] sm:$0xff]
    %v108 = vld [vmem:[%s1 + $0x70] sm:$0xff]
    %v109 = vld [vmem:[%s1 + $0x78] sm:$0xff]
    %v110 = vld [vmem:[#allocation2] sm:$0xff]
    %vm111 = vcmask 64512
    %v113 = vsel %vm111, %v94, 0
    %v116 = vsel %vm111, %v95, 0
    %v119 = vsel %vm111, %v96, 0
    %v122 = vsel %vm111, %v97, 0
    %v125 = vsel %vm111, %v98, 0
    %v128 = vsel %vm111, %v99, 0
    %v131 = vsel %vm111, %v100, 0
    %v134 = vsel %vm111, %v101, 0
    %v137 = vsel %vm111, %v102, 0
    %v140 = vsel %vm111, %v103, 0
    %v143 = vsel %vm111, %v104, 0
    %v146 = vsel %vm111, %v105, 0
    %v149 = vsel %vm111, %v106, 0
    %v152 = vsel %vm111, %v107, 0
    %v155 = vsel %vm111, %v108, 0
    %v158 = vsel %vm111, %v109, 0
    %160 = vmatprep.subr.mxu0 0.0
    %161 = vmatpush1.msra.mxu0 0.0
    %162 = vmatprep.subr.mxu0 0.0
    %163 = vmatpush1.msra.mxu0 0.0
    %164 = vmatprep.subr.mxu0 0.0
    %165 = vmatpush1.msra.mxu0 0.0
    %166 = vmatprep.subr.mxu0 0.0
    %167 = vmatpush1.msra.mxu0 0.0
    %168 = vmatprep.subr.mxu0 0.0
    %169 = vmatpush1.msra.mxu0 0.0
    %170 = vmatprep.subr.mxu0 0.0
    %171 = vmatpush1.msra.mxu0 0.0
    %172 = vmatprep.subr.mxu0 0.0
    %173 = vmatpush1.msra.mxu0 0.0
    %174 = vmatprep.subr.mxu0 0.0
    %175 = vmatpush1.msra.mxu0 0.0
    %176 = vmatprep.subr.mxu0 0.0
    %177 = vmatpush1.msra.mxu0 0.0
    %178 = vmatprep.subr.mxu0 0.0
    %179 = vmatpush1.msra.mxu0 0.0
    %180 = vmatprep.subr.mxu0 0.0
    %181 = vmatpush1.msra.mxu0 0.0
    %182 = vmatprep.subr.mxu0 0.0
    %183 = vmatpush1.msra.mxu0 0.0
    %184 = vmatprep.subr.mxu0 0.0
    %185 = vmatpush1.msra.mxu0 0.0
    %186 = vmatprep.subr.mxu0 0.0
    %187 = vmatpush1.msra.mxu0 0.0
    %188 = vmatprep.subr.mxu0 0.0
    %189 = vmatpush1.msra.mxu0 0.0
    %190 = vmatprep.subr.mxu0 0.0
    %191 = vmatpush1.msra.mxu0 %v110
    %192 = vmatprep.subr.mxu0 0.0
    %193 = vmatpush2.msra.mxu0 0.0
    %194 = vmatprep.subr.mxu0 0.0
    %195 = vmatpush2.msra.mxu0 0.0
    %196 = vmatprep.subr.mxu0 0.0
    %197 = vmatpush2.msra.mxu0 0.0
    %198 = vmatprep.subr.mxu0 0.0
    %199 = vmatpush2.msra.mxu0 0.0
    %200 = vmatprep.subr.mxu0 0.0
    %201 = vmatpush2.msra.mxu0 0.0
    %202 = vmatprep.subr.mxu0 0.0
    %203 = vmatpush2.msra.mxu0 0.0
    %204 = vmatprep.subr.mxu0 0.0
    %205 = vmatpush2.msra.mxu0 0.0
    %206 = vmatprep.subr.mxu0 0.0
    %207 = vmatpush2.msra.mxu0 0.0
    %208 = vmatprep.subr.mxu0 0.0
    %209 = vmatpush2.msra.mxu0 0.0
    %210 = vmatprep.subr.mxu0 0.0
    %211 = vmatpush2.msra.mxu0 0.0
    %212 = vmatprep.subr.mxu0 0.0
    %213 = vmatpush2.msra.mxu0 0.0
    %214 = vmatprep.subr.mxu0 0.0
    %215 = vmatpush2.msra.mxu0 0.0
    %216 = vmatprep.subr.mxu0 0.0
    %217 = vmatpush2.msra.mxu0 0.0
    %218 = vmatprep.subr.mxu0 0.0
    %219 = vmatpush2.msra.mxu0 0.0
    %220 = vmatprep.subr.mxu0 0.0
    %221 = vmatpush2.msra.mxu0 0.0
    %222 = vmatprep.subr.mxu0 0.0
    %223 = vmatpush2.msra.mxu0 0.0
    %224 = vmatprep.mubr.f32.mxu0 0.0
    %225 = vmatmul.mubr.f32.gmra.mxu0 %v113
    %v226 = vpop.f32.mrf.mxu0
    %v227 = vadd.f32 0.0, %v226
    %v228 = vpop.f32.mrf.mxu0
    %229 = vmatprep.mubr.f32.mxu0 0.0
    %230 = vmatmul.mubr.f32.gmra.mxu0 %v116
    %v231 = vpop.f32.mrf.mxu0
    %v232 = vadd.f32 0.0, %v231
    %v233 = vpop.f32.mrf.mxu0
    %234 = vmatprep.mubr.f32.mxu0 0.0
    %235 = vmatmul.mubr.f32.gmra.mxu0 %v119
    %v236 = vpop.f32.mrf.mxu0
    %v237 = vadd.f32 0.0, %v236
    %v238 = vpop.f32.mrf.mxu0
    %239 = vmatprep.mubr.f32.mxu0 0.0
    %240 = vmatmul.mubr.f32.gmra.mxu0 %v122
    %v241 = vpop.f32.mrf.mxu0
    %v242 = vadd.f32 0.0, %v241
    %v243 = vpop.f32.mrf.mxu0
    %244 = vmatprep.mubr.f32.mxu0 0.0
    %245 = vmatmul.mubr.f32.gmra.mxu0 %v125
    %v246 = vpop.f32.mrf.mxu0
    %v247 = vadd.f32 0.0, %v246
    %v248 = vpop.f32.mrf.mxu0
    %249 = vmatprep.mubr.f32.mxu0 0.0
    %250 = vmatmul.mubr.f32.gmra.mxu0 %v128
    %v251 = vpop.f32.mrf.mxu0
    %v252 = vadd.f32 0.0, %v251
    %v253 = vpop.f32.mrf.mxu0
    %254 = vmatprep.mubr.f32.mxu0 0.0
    %255 = vmatmul.mubr.f32.gmra.mxu0 %v131
    %v256 = vpop.f32.mrf.mxu0
    %v257 = vadd.f32 0.0, %v256
    %v258 = vpop.f32.mrf.mxu0
    %259 = vmatprep.mubr.f32.mxu0 0.0
    %260 = vmatmul.mubr.f32.gmra.mxu0 %v134
    %v261 = vpop.f32.mrf.mxu0
    %v262 = vadd.f32 0.0, %v261
    %v263 = vpop.f32.mrf.mxu0
    %264 = vmatprep.mubr.f32.mxu0 0.0
    %265 = vmatmul.mubr.f32.gmra.mxu0 %v137
    %v266 = vpop.f32.mrf.mxu0
    %v267 = vadd.f32 0.0, %v266
    %v268 = vpop.f32.mrf.mxu0
    %269 = vmatprep.mubr.f32.mxu0 0.0
    %270 = vmatmul.mubr.f32.gmra.mxu0 %v140
    %v271 = vpop.f32.mrf.mxu0
    %v272 = vadd.f32 0.0, %v271
    %v273 = vpop.f32.mrf.mxu0
    %274 = vmatprep.mubr.f32.mxu0 0.0
    %275 = vmatmul.mubr.f32.gmra.mxu0 %v143
    %v276 = vpop.f32.mrf.mxu0
    %v277 = vadd.f32 0.0, %v276
    %v278 = vpop.f32.mrf.mxu0
    %279 = vmatprep.mubr.f32.mxu0 0.0
    %280 = vmatmul.mubr.f32.gmra.mxu0 %v146
    %v281 = vpop.f32.mrf.mxu0
    %v282 = vadd.f32 0.0, %v281
    %v283 = vpop.f32.mrf.mxu0
    %284 = vmatprep.mubr.f32.mxu0 0.0
    %285 = vmatmul.mubr.f32.gmra.mxu0 %v149
    %v286 = vpop.f32.mrf.mxu0
    %v287 = vadd.f32 0.0, %v286
    %v288 = vpop.f32.mrf.mxu0
    %289 = vmatprep.mubr.f32.mxu0 0.0
    %290 = vmatmul.mubr.f32.gmra.mxu0 %v152
    %v291 = vpop.f32.mrf.mxu0
    %v292 = vadd.f32 0.0, %v291
    %v293 = vpop.f32.mrf.mxu0
    %294 = vmatprep.mubr.f32.mxu0 0.0
    %295 = vmatmul.mubr.f32.gmra.mxu0 %v155
    %v296 = vpop.f32.mrf.mxu0
    %v297 = vadd.f32 0.0, %v296
    %v298 = vpop.f32.mrf.mxu0
    %299 = vmatprep.mubr.f32.mxu0 0.0
    %300 = vmatmul.mubr.f32.gmra.mxu0 %v158
    %v301 = vpop.f32.mrf.mxu0
    %v302 = vadd.f32 0.0, %v301
    %v303 = vpop.f32.mrf.mxu0
    %304 = vdwg.mxu0
    %vm305 = vcmask 130048
    %v307 = vsel %vm305, %v76, 0
    %v310 = vsel %vm305, %v77, 0
    %v313 = vsel %vm305, %v78, 0
    %v316 = vsel %vm305, %v79, 0
    %v319 = vsel %vm305, %v80, 0
    %v322 = vsel %vm305, %v81, 0
    %v325 = vsel %vm305, %v82, 0
    %v328 = vsel %vm305, %v83, 0
    %v331 = vsel %vm305, %v84, 0
    %v334 = vsel %vm305, %v85, 0
    %v337 = vsel %vm305, %v86, 0
    %v340 = vsel %vm305, %v87, 0
    %v343 = vsel %vm305, %v88, 0
    %v346 = vsel %vm305, %v89, 0
    %v349 = vsel %vm305, %v90, 0
    %v352 = vsel %vm305, %v91, 0
    %354 = vmatprep.subr.mxu0 0.0
    %355 = vmatpush1.msra.mxu0 0.0
    %356 = vmatprep.subr.mxu0 0.0
    %357 = vmatpush1.msra.mxu0 0.0
    %358 = vmatprep.subr.mxu0 0.0
    %359 = vmatpush1.msra.mxu0 0.0
    %360 = vmatprep.subr.mxu0 0.0
    %361 = vmatpush1.msra.mxu0 0.0
    %362 = vmatprep.subr.mxu0 0.0
    %363 = vmatpush1.msra.mxu0 0.0
    %364 = vmatprep.subr.mxu0 0.0
    %365 = vmatpush1.msra.mxu0 0.0
    %366 = vmatprep.subr.mxu0 0.0
    %367 = vmatpush1.msra.mxu0 0.0
    %368 = vmatprep.subr.mxu0 0.0
    %369 = vmatpush1.msra.mxu0 0.0
    %370 = vmatprep.subr.mxu0 0.0
    %371 = vmatpush1.msra.mxu0 0.0
    %372 = vmatprep.subr.mxu0 0.0
    %373 = vmatpush1.msra.mxu0 0.0
    %374 = vmatprep.subr.mxu0 0.0
    %375 = vmatpush1.msra.mxu0 0.0
    %376 = vmatprep.subr.mxu0 0.0
    %377 = vmatpush1.msra.mxu0 0.0
    %378 = vmatprep.subr.mxu0 0.0
    %379 = vmatpush1.msra.mxu0 0.0
    %380 = vmatprep.subr.mxu0 0.0
    %381 = vmatpush1.msra.mxu0 0.0
    %382 = vmatprep.subr.mxu0 0.0
    %383 = vmatpush1.msra.mxu0 %v93
    %384 = vmatprep.subr.mxu0 0.0
    %385 = vmatpush1.msra.mxu0 %v92
    %386 = vmatprep.subr.mxu0 0.0
    %387 = vmatpush2.msra.mxu0 0.0
    %388 = vmatprep.subr.mxu0 0.0
    %389 = vmatpush2.msra.mxu0 0.0
    %390 = vmatprep.subr.mxu0 0.0
    %391 = vmatpush2.msra.mxu0 0.0
    %392 = vmatprep.subr.mxu0 0.0
    %393 = vmatpush2.msra.mxu0 0.0
    %394 = vmatprep.subr.mxu0 0.0
    %395 = vmatpush2.msra.mxu0 0.0
    %396 = vmatprep.subr.mxu0 0.0
    %397 = vmatpush2.msra.mxu0 0.0
    %398 = vmatprep.subr.mxu0 0.0
    %399 = vmatpush2.msra.mxu0 0.0
    %400 = vmatprep.subr.mxu0 0.0
    %401 = vmatpush2.msra.mxu0 0.0
    %402 = vmatprep.subr.mxu0 0.0
    %403 = vmatpush2.msra.mxu0 0.0
    %404 = vmatprep.subr.mxu0 0.0
    %405 = vmatpush2.msra.mxu0 0.0
    %406 = vmatprep.subr.mxu0 0.0
    %407 = vmatpush2.msra.mxu0 0.0
    %408 = vmatprep.subr.mxu0 0.0
    %409 = vmatpush2.msra.mxu0 0.0
    %410 = vmatprep.subr.mxu0 0.0
    %411 = vmatpush2.msra.mxu0 0.0
    %412 = vmatprep.subr.mxu0 0.0
    %413 = vmatpush2.msra.mxu0 0.0
    %414 = vmatprep.subr.mxu0 0.0
    %415 = vmatpush2.msra.mxu0 0.0
    %416 = vmatprep.subr.mxu0 0.0
    %417 = vmatpush2.msra.mxu0 0.0
    %418 = vmatprep.mubr.f32.mxu0 0.0
    %419 = vmatmul.mubr.f32.gmra.mxu0 %v307
    %v420 = vpop.f32.mrf.mxu0
    %v421 = vadd.f32 %v227, %v420
    %v422 = vpop.f32.mrf.mxu0
    %423 = vmatprep.mubr.f32.mxu0 0.0
    %424 = vmatmul.mubr.f32.gmra.mxu0 %v310
    %v425 = vpop.f32.mrf.mxu0
    %v426 = vadd.f32 %v232, %v425
    %v427 = vpop.f32.mrf.mxu0
    %428 = vmatprep.mubr.f32.mxu0 0.0
    %429 = vmatmul.mubr.f32.gmra.mxu0 %v313
    %v430 = vpop.f32.mrf.mxu0
    %v431 = vadd.f32 %v237, %v430
    %v432 = vpop.f32.mrf.mxu0
    %433 = vmatprep.mubr.f32.mxu0 0.0
    %434 = vmatmul.mubr.f32.gmra.mxu0 %v316
    %v435 = vpop.f32.mrf.mxu0
    %v436 = vadd.f32 %v242, %v435
    %v437 = vpop.f32.mrf.mxu0
    %438 = vmatprep.mubr.f32.mxu0 0.0
    %439 = vmatmul.mubr.f32.gmra.mxu0 %v319
    %v440 = vpop.f32.mrf.mxu0
    %v441 = vadd.f32 %v247, %v440
    %v442 = vpop.f32.mrf.mxu0
    %443 = vmatprep.mubr.f32.mxu0 0.0
    %444 = vmatmul.mubr.f32.gmra.mxu0 %v322
    %v445 = vpop.f32.mrf.mxu0
    %v446 = vadd.f32 %v252, %v445
    %v447 = vpop.f32.mrf.mxu0
    %448 = vmatprep.mubr.f32.mxu0 0.0
    %449 = vmatmul.mubr.f32.gmra.mxu0 %v325
    %v450 = vpop.f32.mrf.mxu0
    %v451 = vadd.f32 %v257, %v450
    %v452 = vpop.f32.mrf.mxu0
    %453 = vmatprep.mubr.f32.mxu0 0.0
    %454 = vmatmul.mubr.f32.gmra.mxu0 %v328
    %v455 = vpop.f32.mrf.mxu0
    %v456 = vadd.f32 %v262, %v455
    %v457 = vpop.f32.mrf.mxu0
    %458 = vmatprep.mubr.f32.mxu0 0.0
    %459 = vmatmul.mubr.f32.gmra.mxu0 %v331
    %v460 = vpop.f32.mrf.mxu0
    %v461 = vadd.f32 %v267, %v460
    %v462 = vpop.f32.mrf.mxu0
    %463 = vmatprep.mubr.f32.mxu0 0.0
    %464 = vmatmul.mubr.f32.gmra.mxu0 %v334
    %v465 = vpop.f32.mrf.mxu0
    %v466 = vadd.f32 %v272, %v465
    %v467 = vpop.f32.mrf.mxu0
    %468 = vmatprep.mubr.f32.mxu0 0.0
    %469 = vmatmul.mubr.f32.gmra.mxu0 %v337
    %v470 = vpop.f32.mrf.mxu0
    %v471 = vadd.f32 %v277, %v470
    %v472 = vpop.f32.mrf.mxu0
    %473 = vmatprep.mubr.f32.mxu0 0.0
    %474 = vmatmul.mubr.f32.gmra.mxu0 %v340
    %v475 = vpop.f32.mrf.mxu0
    %v476 = vadd.f32 %v282, %v475
    %v477 = vpop.f32.mrf.mxu0
    %478 = vmatprep.mubr.f32.mxu0 0.0
    %479 = vmatmul.mubr.f32.gmra.mxu0 %v343
    %v480 = vpop.f32.mrf.mxu0
    %v481 = vadd.f32 %v287, %v480
    %v482 = vpop.f32.mrf.mxu0
    %483 = vmatprep.mubr.f32.mxu0 0.0
    %484 = vmatmul.mubr.f32.gmra.mxu0 %v346
    %v485 = vpop.f32.mrf.mxu0
    %v486 = vadd.f32 %v292, %v485
    %v487 = vpop.f32.mrf.mxu0
    %488 = vmatprep.mubr.f32.mxu0 0.0
    %489 = vmatmul.mubr.f32.gmra.mxu0 %v349
    %v490 = vpop.f32.mrf.mxu0
    %v491 = vadd.f32 %v297, %v490
    %v492 = vpop.f32.mrf.mxu0
    %493 = vmatprep.mubr.f32.mxu0 0.0
    %494 = vmatmul.mubr.f32.gmra.mxu0 %v352
    %v495 = vpop.f32.mrf.mxu0
    %v496 = vadd.f32 %v302, %v495
    %v497 = vpop.f32.mrf.mxu0
    %498 = vdwg.mxu0
    %v499 = vld [vmem:[%s4] sm:$0x1]
    %v501 = vlaneseq
    %v502 = vshrl.u32 %v501, 7
    %v503 = vsub.s32 0, %v502
    %v504 = vrot.slane %v499, %v503
    %v506 = vadd.f32 %v421, %v504
    %v507 = vadd.f32 %v426, %v504
    %v508 = vadd.f32 %v431, %v504
    %v509 = vadd.f32 %v436, %v504
    %v510 = vadd.f32 %v441, %v504
    %v511 = vadd.f32 %v446, %v504
    %v512 = vadd.f32 %v451, %v504
    %v513 = vadd.f32 %v456, %v504
    %v514 = vadd.f32 %v461, %v504
    %v515 = vadd.f32 %v466, %v504
    %v516 = vadd.f32 %v471, %v504
    %v517 = vadd.f32 %v476, %v504
    %v518 = vadd.f32 %v481, %v504
    %v519 = vadd.f32 %v486, %v504
    %v520 = vadd.f32 %v491, %v504
    %v521 = vadd.f32 %v496, %v504
    %v522 = vmax.f32 %v506, 0.0
    %v523 = vmax.f32 %v507, 0.0
    %v524 = vmax.f32 %v508, 0.0
    %v525 = vmax.f32 %v509, 0.0
    %v526 = vmax.f32 %v510, 0.0
    %v527 = vmax.f32 %v511, 0.0
    %v528 = vmax.f32 %v512, 0.0
    %v529 = vmax.f32 %v513, 0.0
    %v530 = vmax.f32 %v514, 0.0
    %v531 = vmax.f32 %v515, 0.0
    %v532 = vmax.f32 %v516, 0.0
    %v533 = vmax.f32 %v517, 0.0
    %v534 = vmax.f32 %v518, 0.0
    %v535 = vmax.f32 %v519, 0.0
    %v536 = vmax.f32 %v520, 0.0
    %v537 = vmax.f32 %v521, 0.0
    %v538 = vld [vmem:[%s5] sm:$0x1]
    %v539 = vld [vmem:[%s6] sm:$0x1]
    %v540 = vadd.f32 %v522, %v523
    %v541 = vadd.f32 %v540, %v524
    %v542 = vadd.f32 %v541, %v525
    %v543 = vadd.f32 %v542, %v526
    %v544 = vadd.f32 %v543, %v527
    %v545 = vadd.f32 %v544, %v528
    %v546 = vadd.f32 %v545, %v529
    %v547 = vadd.f32 %v546, %v530
    %v548 = vadd.f32 %v547, %v531
    %v549 = vadd.f32 %v548, %v532
    %v550 = vadd.f32 %v549, %v533
    %v551 = vadd.f32 %v550, %v534
    %v552 = vadd.f32 %v551, %v535
    %v553 = vadd.f32 %v552, %v536
    %v554 = vadd.f32 %v553, %v537
    %v555 = vrot.slane %v554, 4
    %v556 = vadd.f32 %v554, %v555
    %v557 = vrot.slane %v556, 2
    %v558 = vadd.f32 %v556, %v557
    %v559 = vrot.slane %v558, 1
    %v560 = vadd.f32 %v558, %v559
    %v561 = vmul.f32 %v522, %v522
    %v562 = vmul.f32 %v523, %v523
    %v563 = vmul.f32 %v524, %v524
    %v564 = vmul.f32 %v525, %v525
    %v565 = vmul.f32 %v526, %v526
    %v566 = vmul.f32 %v527, %v527
    %v567 = vmul.f32 %v528, %v528
    %v568 = vmul.f32 %v529, %v529
    %v569 = vmul.f32 %v530, %v530
    %v570 = vmul.f32 %v531, %v531
    %v571 = vmul.f32 %v532, %v532
    %v572 = vmul.f32 %v533, %v533
    %v573 = vmul.f32 %v534, %v534
    %v574 = vmul.f32 %v535, %v535
    %v575 = vmul.f32 %v536, %v536
    %v576 = vmul.f32 %v537, %v537
    %v577 = vadd.f32 %v561, %v562
    %v578 = vadd.f32 %v577, %v563
    %v579 = vadd.f32 %v578, %v564
    %v580 = vadd.f32 %v579, %v565
    %v581 = vadd.f32 %v580, %v566
    %v582 = vadd.f32 %v581, %v567
    %v583 = vadd.f32 %v582, %v568
    %v584 = vadd.f32 %v583, %v569
    %v585 = vadd.f32 %v584, %v570
    %v586 = vadd.f32 %v585, %v571
    %v587 = vadd.f32 %v586, %v572
    %v588 = vadd.f32 %v587, %v573
    %v589 = vadd.f32 %v588, %v574
    %v590 = vadd.f32 %v589, %v575
    %v591 = vadd.f32 %v590, %v576
    %v592 = vrot.slane %v591, 4
    %v593 = vadd.f32 %v591, %v592
    %v594 = vrot.slane %v593, 2
    %v595 = vadd.f32 %v593, %v594
    %v596 = vrot.slane %v595, 1
    %v597 = vadd.f32 %v595, %v596
    %v598 = vmul.f32 %v560, 0.0078125
    %v599 = vmul.f32 %v597, 0.0078125
    %v600 = vmul.f32 %v598, %v598
    %v601 = vsub.f32 %v599, %v600
    %v602 = vadd.f32 %v601, 1e-05
    %v603 = vrsqrt.pop %v602
    %v604 = vmul.f32 %v538, %v603
    %v605 = vmul.f32 %v598, %v604
    %v606 = vsub.f32 %v539, %v605
    %v608 = vlaneseq
    %v609 = vshrl.u32 %v608, 7
    %v610 = vsub.s32 0, %v609
    %v611 = vrot.slane %v604, %v610
    %v613 = vmul.f32 %v522, %v611
    %v614 = vmul.f32 %v523, %v611
    %v615 = vmul.f32 %v524, %v611
    %v616 = vmul.f32 %v525, %v611
    %v617 = vmul.f32 %v526, %v611
    %v618 = vmul.f32 %v527, %v611
    %v619 = vmul.f32 %v528, %v611
    %v620 = vmul.f32 %v529, %v611
    %v621 = vmul.f32 %v530, %v611
    %v622 = vmul.f32 %v531, %v611
    %v623 = vmul.f32 %v532, %v611
    %v624 = vmul.f32 %v533, %v611
    %v625 = vmul.f32 %v534, %v611
    %v626 = vmul.f32 %v535, %v611
    %v627 = vmul.f32 %v536, %v611
    %v628 = vmul.f32 %v537, %v611
    %v630 = vlaneseq
    %v631 = vshrl.u32 %v630, 7
    %v632 = vsub.s32 0, %v631
    %v633 = vrot.slane %v606, %v632
    %v635 = vadd.f32 %v613, %v633
    %v636 = vadd.f32 %v614, %v633
    %v637 = vadd.f32 %v615, %v633
    %v638 = vadd.f32 %v616, %v633
    %v639 = vadd.f32 %v617, %v633
    %v640 = vadd.f32 %v618, %v633
    %v641 = vadd.f32 %v619, %v633
    %v642 = vadd.f32 %v620, %v633
    %v643 = vadd.f32 %v621, %v633
    %v644 = vadd.f32 %v622, %v633
    %v645 = vadd.f32 %v623, %v633
    %v646 = vadd.f32 %v624, %v633
    %v647 = vadd.f32 %v625, %v633
    %v648 = vadd.f32 %v626, %v633
    %v649 = vadd.f32 %v627, %v633
    %v650 = vadd.f32 %v628, %v633
    %v651 = vld [vmem:[%s7] sm:$0xff]
    %v652 = vld [vmem:[%s7 + $0x8] sm:$0xff]
    %v653 = vld [vmem:[%s7 + $0x10] sm:$0xff]
    %v654 = vld [vmem:[%s7 + $0x18] sm:$0xff]
    %v655 = vld [vmem:[%s7 + $0x20] sm:$0xff]
    %v656 = vld [vmem:[%s7 + $0x28] sm:$0xff]
    %v657 = vld [vmem:[%s7 + $0x30] sm:$0xff]
    %v658 = vld [vmem:[%s7 + $0x38] sm:$0xff]
    %v659 = vld [vmem:[%s7 + $0x40] sm:$0xff]
    %v660 = vld [vmem:[%s7 + $0x48] sm:$0xff]
    %v661 = vld [vmem:[%s7 + $0x50] sm:$0xff]
    %v662 = vld [vmem:[%s7 + $0x58] sm:$0xff]
    %v663 = vld [vmem:[%s7 + $0x60] sm:$0xff]
    %v664 = vld [vmem:[%s7 + $0x68] sm:$0xff]
    %v665 = vld [vmem:[%s7 + $0x70] sm:$0xff]
    %v666 = vld [vmem:[%s7 + $0x78] sm:$0xff]
    %v667 = vld [vmem:[%s8] sm:$0x1]
    %v669 = vlaneseq
    %v670 = vshrl.u32 %v669, 7
    %v671 = vsub.s32 0, %v670
    %v672 = vrot.slane %v667, %v671
    %674 = vmatprep.subr.mxu0 0.0
    %675 = vmatpush1.msra.mxu0 %v666
    %676 = vmatprep.subr.mxu0 0.0
    %677 = vmatpush1.msra.mxu0 %v665
    %678 = vmatprep.subr.mxu0 0.0
    %679 = vmatpush1.msra.mxu0 %v664
    %680 = vmatprep.subr.mxu0 0.0
    %681 = vmatpush1.msra.mxu0 %v663
    %682 = vmatprep.subr.mxu0 0.0
    %683 = vmatpush1.msra.mxu0 %v662
    %684 = vmatprep.subr.mxu0 0.0
    %685 = vmatpush1.msra.mxu0 %v661
    %686 = vmatprep.subr.mxu0 0.0
    %687 = vmatpush1.msra.mxu0 %v660
    %688 = vmatprep.subr.mxu0 0.0
    %689 = vmatpush1.msra.mxu0 %v659
    %690 = vmatprep.subr.mxu0 0.0
    %691 = vmatpush1.msra.mxu0 %v658
    %692 = vmatprep.subr.mxu0 0.0
    %693 = vmatpush1.msra.mxu0 %v657
    %694 = vmatprep.subr.mxu0 0.0
    %695 = vmatpush1.msra.mxu0 %v656
    %696 = vmatprep.subr.mxu0 0.0
    %697 = vmatpush1.msra.mxu0 %v655
    %698 = vmatprep.subr.mxu0 0.0
    %699 = vmatpush1.msra.mxu0 %v654
    %700 = vmatprep.subr.mxu0 0.0
    %701 = vmatpush1.msra.mxu0 %v653
    %702 = vmatprep.subr.mxu0 0.0
    %703 = vmatpush1.msra.mxu0 %v652
    %704 = vmatprep.subr.mxu0 0.0
    %705 = vmatpush1.msra.mxu0 %v651
    %706 = vmatprep.subr.mxu0 0.0
    %707 = vmatpush2.msra.mxu0 0.0
    %708 = vmatprep.subr.mxu0 0.0
    %709 = vmatpush2.msra.mxu0 0.0
    %710 = vmatprep.subr.mxu0 0.0
    %711 = vmatpush2.msra.mxu0 0.0
    %712 = vmatprep.subr.mxu0 0.0
    %713 = vmatpush2.msra.mxu0 0.0
    %714 = vmatprep.subr.mxu0 0.0
    %715 = vmatpush2.msra.mxu0 0.0
    %716 = vmatprep.subr.mxu0 0.0
    %717 = vmatpush2.msra.mxu0 0.0
    %718 = vmatprep.subr.mxu0 0.0
    %719 = vmatpush2.msra.mxu0 0.0
    %720 = vmatprep.subr.mxu0 0.0
    %721 = vmatpush2.msra.mxu0 0.0
    %722 = vmatprep.subr.mxu0 0.0
    %723 = vmatpush2.msra.mxu0 0.0
    %724 = vmatprep.subr.mxu0 0.0
    %725 = vmatpush2.msra.mxu0 0.0
    %726 = vmatprep.subr.mxu0 0.0
    %727 = vmatpush2.msra.mxu0 0.0
    %728 = vmatprep.subr.mxu0 0.0
    %729 = vmatpush2.msra.mxu0 0.0
    %730 = vmatprep.subr.mxu0 0.0
    %731 = vmatpush2.msra.mxu0 0.0
    %732 = vmatprep.subr.mxu0 0.0
    %733 = vmatpush2.msra.mxu0 0.0
    %734 = vmatprep.subr.mxu0 0.0
    %735 = vmatpush2.msra.mxu0 0.0
    %736 = vmatprep.subr.mxu0 0.0
    %737 = vmatpush2.msra.mxu0 0.0
    %738 = vmatprep.mubr.f32.mxu0 0.0
    %739 = vmatmul.mubr.f32.gmra.mxu0 %v635
    %v740 = vpop.f32.mrf.mxu0
    %v741 = vadd.f32 %v672, %v740
    %v742 = vpop.f32.mrf.mxu0
    %743 = vmatprep.mubr.f32.mxu0 0.0
    %744 = vmatmul.mubr.f32.gmra.mxu0 %v636
    %v745 = vpop.f32.mrf.mxu0
    %v746 = vadd.f32 %v672, %v745
    %v747 = vpop.f32.mrf.mxu0
    %748 = vmatprep.mubr.f32.mxu0 0.0
    %749 = vmatmul.mubr.f32.gmra.mxu0 %v637
    %v750 = vpop.f32.mrf.mxu0
    %v751 = vadd.f32 %v672, %v750
    %v752 = vpop.f32.mrf.mxu0
    %753 = vmatprep.mubr.f32.mxu0 0.0
    %754 = vmatmul.mubr.f32.gmra.mxu0 %v638
    %v755 = vpop.f32.mrf.mxu0
    %v756 = vadd.f32 %v672, %v755
    %v757 = vpop.f32.mrf.mxu0
    %758 = vmatprep.mubr.f32.mxu0 0.0
    %759 = vmatmul.mubr.f32.gmra.mxu0 %v639
    %v760 = vpop.f32.mrf.mxu0
    %v761 = vadd.f32 %v672, %v760
    %v762 = vpop.f32.mrf.mxu0
    %763 = vmatprep.mubr.f32.mxu0 0.0
    %764 = vmatmul.mubr.f32.gmra.mxu0 %v640
    %v765 = vpop.f32.mrf.mxu0
    %v766 = vadd.f32 %v672, %v765
    %v767 = vpop.f32.mrf.mxu0
    %768 = vmatprep.mubr.f32.mxu0 0.0
    %769 = vmatmul.mubr.f32.gmra.mxu0 %v641
    %v770 = vpop.f32.mrf.mxu0
    %v771 = vadd.f32 %v672, %v770
    %v772 = vpop.f32.mrf.mxu0
    %773 = vmatprep.mubr.f32.mxu0 0.0
    %774 = vmatmul.mubr.f32.gmra.mxu0 %v642
    %v775 = vpop.f32.mrf.mxu0
    %v776 = vadd.f32 %v672, %v775
    %v777 = vpop.f32.mrf.mxu0
    %778 = vmatprep.mubr.f32.mxu0 0.0
    %779 = vmatmul.mubr.f32.gmra.mxu0 %v643
    %v780 = vpop.f32.mrf.mxu0
    %v781 = vadd.f32 %v672, %v780
    %v782 = vpop.f32.mrf.mxu0
    %783 = vmatprep.mubr.f32.mxu0 0.0
    %784 = vmatmul.mubr.f32.gmra.mxu0 %v644
    %v785 = vpop.f32.mrf.mxu0
    %v786 = vadd.f32 %v672, %v785
    %v787 = vpop.f32.mrf.mxu0
    %788 = vmatprep.mubr.f32.mxu0 0.0
    %789 = vmatmul.mubr.f32.gmra.mxu0 %v645
    %v790 = vpop.f32.mrf.mxu0
    %v791 = vadd.f32 %v672, %v790
    %v792 = vpop.f32.mrf.mxu0
    %793 = vmatprep.mubr.f32.mxu0 0.0
    %794 = vmatmul.mubr.f32.gmra.mxu0 %v646
    %v795 = vpop.f32.mrf.mxu0
    %v796 = vadd.f32 %v672, %v795
    %v797 = vpop.f32.mrf.mxu0
    %798 = vmatprep.mubr.f32.mxu0 0.0
    %799 = vmatmul.mubr.f32.gmra.mxu0 %v647
    %v800 = vpop.f32.mrf.mxu0
    %v801 = vadd.f32 %v672, %v800
    %v802 = vpop.f32.mrf.mxu0
    %803 = vmatprep.mubr.f32.mxu0 0.0
    %804 = vmatmul.mubr.f32.gmra.mxu0 %v648
    %v805 = vpop.f32.mrf.mxu0
    %v806 = vadd.f32 %v672, %v805
    %v807 = vpop.f32.mrf.mxu0
    %808 = vmatprep.mubr.f32.mxu0 0.0
    %809 = vmatmul.mubr.f32.gmra.mxu0 %v649
    %v810 = vpop.f32.mrf.mxu0
    %v811 = vadd.f32 %v672, %v810
    %v812 = vpop.f32.mrf.mxu0
    %813 = vmatprep.mubr.f32.mxu0 0.0
    %814 = vmatmul.mubr.f32.gmra.mxu0 %v650
    %v815 = vpop.f32.mrf.mxu0
    %v816 = vadd.f32 %v672, %v815
    %v817 = vpop.f32.mrf.mxu0
    %818 = vdwg.mxu0
    %v819 = vmax.f32 %v741, 0.0
    %v820 = vmax.f32 %v746, 0.0
    %v821 = vmax.f32 %v751, 0.0
    %v822 = vmax.f32 %v756, 0.0
    %v823 = vmax.f32 %v761, 0.0
    %v824 = vmax.f32 %v766, 0.0
    %v825 = vmax.f32 %v771, 0.0
    %v826 = vmax.f32 %v776, 0.0
    %v827 = vmax.f32 %v781, 0.0
    %v828 = vmax.f32 %v786, 0.0
    %v829 = vmax.f32 %v791, 0.0
    %v830 = vmax.f32 %v796, 0.0
    %v831 = vmax.f32 %v801, 0.0
    %v832 = vmax.f32 %v806, 0.0
    %v833 = vmax.f32 %v811, 0.0
    %v834 = vmax.f32 %v816, 0.0
    %v835 = vld [vmem:[%s9] sm:$0x1]
    %v836 = vld [vmem:[%s10] sm:$0x1]
    %v837 = vadd.f32 %v819, %v820
    %v838 = vadd.f32 %v837, %v821
    %v839 = vadd.f32 %v838, %v822
    %v840 = vadd.f32 %v839, %v823
    %v841 = vadd.f32 %v840, %v824
    %v842 = vadd.f32 %v841, %v825
    %v843 = vadd.f32 %v842, %v826
    %v844 = vadd.f32 %v843, %v827
    %v845 = vadd.f32 %v844, %v828
    %v846 = vadd.f32 %v845, %v829
    %v847 = vadd.f32 %v846, %v830
    %v848 = vadd.f32 %v847, %v831
    %v849 = vadd.f32 %v848, %v832
    %v850 = vadd.f32 %v849, %v833
    %v851 = vadd.f32 %v850, %v834
    %v852 = vrot.slane %v851, 4
    %v853 = vadd.f32 %v851, %v852
    %v854 = vrot.slane %v853, 2
    %v855 = vadd.f32 %v853, %v854
    %v856 = vrot.slane %v855, 1
    %v857 = vadd.f32 %v855, %v856
    %v858 = vmul.f32 %v819, %v819
    %v859 = vmul.f32 %v820, %v820
    %v860 = vmul.f32 %v821, %v821
    %v861 = vmul.f32 %v822, %v822
    %v862 = vmul.f32 %v823, %v823
    %v863 = vmul.f32 %v824, %v824
    %v864 = vmul.f32 %v825, %v825
    %v865 = vmul.f32 %v826, %v826
    %v866 = vmul.f32 %v827, %v827
    %v867 = vmul.f32 %v828, %v828
    %v868 = vmul.f32 %v829, %v829
    %v869 = vmul.f32 %v830, %v830
    %v870 = vmul.f32 %v831, %v831
    %v871 = vmul.f32 %v832, %v832
    %v872 = vmul.f32 %v833, %v833
    %v873 = vmul.f32 %v834, %v834
    %v874 = vadd.f32 %v858, %v859
    %v875 = vadd.f32 %v874, %v860
    %v876 = vadd.f32 %v875, %v861
    %v877 = vadd.f32 %v876, %v862
    %v878 = vadd.f32 %v877, %v863
    %v879 = vadd.f32 %v878, %v864
    %v880 = vadd.f32 %v879, %v865
    %v881 = vadd.f32 %v880, %v866
    %v882 = vadd.f32 %v881, %v867
    %v883 = vadd.f32 %v882, %v868
    %v884 = vadd.f32 %v883, %v869
    %v885 = vadd.f32 %v884, %v870
    %v886 = vadd.f32 %v885, %v871
    %v887 = vadd.f32 %v886, %v872
    %v888 = vadd.f32 %v887, %v873
    %v889 = vrot.slane %v888, 4
    %v890 = vadd.f32 %v888, %v889
    %v891 = vrot.slane %v890, 2
    %v892 = vadd.f32 %v890, %v891
    %v893 = vrot.slane %v892, 1
    %v894 = vadd.f32 %v892, %v893
    %v895 = vmul.f32 %v857, 0.0078125
    %v896 = vmul.f32 %v894, 0.0078125
    %v897 = vmul.f32 %v895, %v895
    %v898 = vsub.f32 %v896, %v897
    %v899 = vadd.f32 %v898, 1e-05
    %v900 = vrsqrt.pop %v899
    %v901 = vmul.f32 %v835, %v900
    %v902 = vmul.f32 %v895, %v901
    %v903 = vsub.f32 %v836, %v902
    %v905 = vlaneseq
    %v906 = vshrl.u32 %v905, 7
    %v907 = vsub.s32 0, %v906
    %v908 = vrot.slane %v901, %v907
    %v910 = vmul.f32 %v819, %v908
    %v911 = vmul.f32 %v820, %v908
    %v912 = vmul.f32 %v821, %v908
    %v913 = vmul.f32 %v822, %v908
    %v914 = vmul.f32 %v823, %v908
    %v915 = vmul.f32 %v824, %v908
    %v916 = vmul.f32 %v825, %v908
    %v917 = vmul.f32 %v826, %v908
    %v918 = vmul.f32 %v827, %v908
    %v919 = vmul.f32 %v828, %v908
    %v920 = vmul.f32 %v829, %v908
    %v921 = vmul.f32 %v830, %v908
    %v922 = vmul.f32 %v831, %v908
    %v923 = vmul.f32 %v832, %v908
    %v924 = vmul.f32 %v833, %v908
    %v925 = vmul.f32 %v834, %v908
    %v927 = vlaneseq
    %v928 = vshrl.u32 %v927, 7
    %v929 = vsub.s32 0, %v928
    %v930 = vrot.slane %v903, %v929
    %v932 = vadd.f32 %v910, %v930
    %v933 = vadd.f32 %v911, %v930
    %v934 = vadd.f32 %v912, %v930
    %v935 = vadd.f32 %v913, %v930
    %v936 = vadd.f32 %v914, %v930
    %v937 = vadd.f32 %v915, %v930
    %v938 = vadd.f32 %v916, %v930
    %v939 = vadd.f32 %v917, %v930
    %v940 = vadd.f32 %v918, %v930
    %v941 = vadd.f32 %v919, %v930
    %v942 = vadd.f32 %v920, %v930
    %v943 = vadd.f32 %v921, %v930
    %v944 = vadd.f32 %v922, %v930
    %v945 = vadd.f32 %v923, %v930
    %v946 = vadd.f32 %v924, %v930
    %v947 = vadd.f32 %v925, %v930
    %v948 = vld [vmem:[%s11] sm:$0xff]
    %v949 = vld [vmem:[%s11 + $0x8] sm:$0xff]
    %v950 = vld [vmem:[%s11 + $0x10] sm:$0xff]
    %v951 = vld [vmem:[%s11 + $0x18] sm:$0xff]
    %v952 = vld [vmem:[%s11 + $0x20] sm:$0xff]
    %v953 = vld [vmem:[%s11 + $0x28] sm:$0xff]
    %v954 = vld [vmem:[%s11 + $0x30] sm:$0xff]
    %v955 = vld [vmem:[%s11 + $0x38] sm:$0xff]
    %v956 = vld [vmem:[%s11 + $0x40] sm:$0xff]
    %v957 = vld [vmem:[%s11 + $0x48] sm:$0xff]
    %v958 = vld [vmem:[%s11 + $0x50] sm:$0xff]
    %v959 = vld [vmem:[%s11 + $0x58] sm:$0xff]
    %v960 = vld [vmem:[%s11 + $0x60] sm:$0xff]
    %v961 = vld [vmem:[%s11 + $0x68] sm:$0xff]
    %v962 = vld [vmem:[%s11 + $0x70] sm:$0xff]
    %v963 = vld [vmem:[%s11 + $0x78] sm:$0xff]
    %v964 = vld [vmem:[%s12] sm:$0x1]
    %v966 = vlaneseq
    %v967 = vshrl.u32 %v966, 7
    %v968 = vsub.s32 0, %v967
    %v969 = vrot.slane %v964, %v968
    %971 = vmatprep.subr.mxu0 0.0
    %972 = vmatpush1.msra.mxu0 %v963
    %973 = vmatprep.subr.mxu0 0.0
    %974 = vmatpush1.msra.mxu0 %v962
    %975 = vmatprep.subr.mxu0 0.0
    %976 = vmatpush1.msra.mxu0 %v961
    %977 = vmatprep.subr.mxu0 0.0
    %978 = vmatpush1.msra.mxu0 %v960
    %979 = vmatprep.subr.mxu0 0.0
    %980 = vmatpush1.msra.mxu0 %v959
    %981 = vmatprep.subr.mxu0 0.0
    %982 = vmatpush1.msra.mxu0 %v958
    %983 = vmatprep.subr.mxu0 0.0
    %984 = vmatpush1.msra.mxu0 %v957
    %985 = vmatprep.subr.mxu0 0.0
    %986 = vmatpush1.msra.mxu0 %v956
    %987 = vmatprep.subr.mxu0 0.0
    %988 = vmatpush1.msra.mxu0 %v955
    %989 = vmatprep.subr.mxu0 0.0
    %990 = vmatpush1.msra.mxu0 %v954
    %991 = vmatprep.subr.mxu0 0.0
    %992 = vmatpush1.msra.mxu0 %v953
    %993 = vmatprep.subr.mxu0 0.0
    %994 = vmatpush1.msra.mxu0 %v952
    %995 = vmatprep.subr.mxu0 0.0
    %996 = vmatpush1.msra.mxu0 %v951
    %997 = vmatprep.subr.mxu0 0.0
    %998 = vmatpush1.msra.mxu0 %v950
    %999 = vmatprep.subr.mxu0 0.0
    %1000 = vmatpush1.msra.mxu0 %v949
    %1001 = vmatprep.subr.mxu0 0.0
    %1002 = vmatpush1.msra.mxu0 %v948
    %1003 = vmatprep.subr.mxu0 0.0
    %1004 = vmatpush2.msra.mxu0 0.0
    %1005 = vmatprep.subr.mxu0 0.0
    %1006 = vmatpush2.msra.mxu0 0.0
    %1007 = vmatprep.subr.mxu0 0.0
    %1008 = vmatpush2.msra.mxu0 0.0
    %1009 = vmatprep.subr.mxu0 0.0
    %1010 = vmatpush2.msra.mxu0 0.0
    %1011 = vmatprep.subr.mxu0 0.0
    %1012 = vmatpush2.msra.mxu0 0.0
    %1013 = vmatprep.subr.mxu0 0.0
    %1014 = vmatpush2.msra.mxu0 0.0
    %1015 = vmatprep.subr.mxu0 0.0
    %1016 = vmatpush2.msra.mxu0 0.0
    %1017 = vmatprep.subr.mxu0 0.0
    %1018 = vmatpush2.msra.mxu0 0.0
    %1019 = vmatprep.subr.mxu0 0.0
    %1020 = vmatpush2.msra.mxu0 0.0
    %1021 = vmatprep.subr.mxu0 0.0
    %1022 = vmatpush2.msra.mxu0 0.0
    %1023 = vmatprep.subr.mxu0 0.0
    %1024 = vmatpush2.msra.mxu0 0.0
    %1025 = vmatprep.subr.mxu0 0.0
    %1026 = vmatpush2.msra.mxu0 0.0
    %1027 = vmatprep.subr.mxu0 0.0
    %1028 = vmatpush2.msra.mxu0 0.0
    %1029 = vmatprep.subr.mxu0 0.0
    %1030 = vmatpush2.msra.mxu0 0.0
    %1031 = vmatprep.subr.mxu0 0.0
    %1032 = vmatpush2.msra.mxu0 0.0
    %1033 = vmatprep.subr.mxu0 0.0
    %1034 = vmatpush2.msra.mxu0 0.0
    %1035 = vmatprep.mubr.f32.mxu0 0.0
    %1036 = vmatmul.mubr.f32.gmra.mxu0 %v932
    %v1037 = vpop.f32.mrf.mxu0
    %v1038 = vadd.f32 %v969, %v1037
    %v1039 = vpop.f32.mrf.mxu0
    %1040 = vmatprep.mubr.f32.mxu0 0.0
    %1041 = vmatmul.mubr.f32.gmra.mxu0 %v933
    %v1042 = vpop.f32.mrf.mxu0
    %v1043 = vadd.f32 %v969, %v1042
    %v1044 = vpop.f32.mrf.mxu0
    %1045 = vmatprep.mubr.f32.mxu0 0.0
    %1046 = vmatmul.mubr.f32.gmra.mxu0 %v934
    %v1047 = vpop.f32.mrf.mxu0
    %v1048 = vadd.f32 %v969, %v1047
    %v1049 = vpop.f32.mrf.mxu0
    %1050 = vmatprep.mubr.f32.mxu0 0.0
    %1051 = vmatmul.mubr.f32.gmra.mxu0 %v935
    %v1052 = vpop.f32.mrf.mxu0
    %v1053 = vadd.f32 %v969, %v1052
    %v1054 = vpop.f32.mrf.mxu0
    %1055 = vmatprep.mubr.f32.mxu0 0.0
    %1056 = vmatmul.mubr.f32.gmra.mxu0 %v936
    %v1057 = vpop.f32.mrf.mxu0
    %v1058 = vadd.f32 %v969, %v1057
    %v1059 = vpop.f32.mrf.mxu0
    %1060 = vmatprep.mubr.f32.mxu0 0.0
    %1061 = vmatmul.mubr.f32.gmra.mxu0 %v937
    %v1062 = vpop.f32.mrf.mxu0
    %v1063 = vadd.f32 %v969, %v1062
    %v1064 = vpop.f32.mrf.mxu0
    %1065 = vmatprep.mubr.f32.mxu0 0.0
    %1066 = vmatmul.mubr.f32.gmra.mxu0 %v938
    %v1067 = vpop.f32.mrf.mxu0
    %v1068 = vadd.f32 %v969, %v1067
    %v1069 = vpop.f32.mrf.mxu0
    %1070 = vmatprep.mubr.f32.mxu0 0.0
    %1071 = vmatmul.mubr.f32.gmra.mxu0 %v939
    %v1072 = vpop.f32.mrf.mxu0
    %v1073 = vadd.f32 %v969, %v1072
    %v1074 = vpop.f32.mrf.mxu0
    %1075 = vmatprep.mubr.f32.mxu0 0.0
    %1076 = vmatmul.mubr.f32.gmra.mxu0 %v940
    %v1077 = vpop.f32.mrf.mxu0
    %v1078 = vadd.f32 %v969, %v1077
    %v1079 = vpop.f32.mrf.mxu0
    %1080 = vmatprep.mubr.f32.mxu0 0.0
    %1081 = vmatmul.mubr.f32.gmra.mxu0 %v941
    %v1082 = vpop.f32.mrf.mxu0
    %v1083 = vadd.f32 %v969, %v1082
    %v1084 = vpop.f32.mrf.mxu0
    %1085 = vmatprep.mubr.f32.mxu0 0.0
    %1086 = vmatmul.mubr.f32.gmra.mxu0 %v942
    %v1087 = vpop.f32.mrf.mxu0
    %v1088 = vadd.f32 %v969, %v1087
    %v1089 = vpop.f32.mrf.mxu0
    %1090 = vmatprep.mubr.f32.mxu0 0.0
    %1091 = vmatmul.mubr.f32.gmra.mxu0 %v943
    %v1092 = vpop.f32.mrf.mxu0
    %v1093 = vadd.f32 %v969, %v1092
    %v1094 = vpop.f32.mrf.mxu0
    %1095 = vmatprep.mubr.f32.mxu0 0.0
    %1096 = vmatmul.mubr.f32.gmra.mxu0 %v944
    %v1097 = vpop.f32.mrf.mxu0
    %v1098 = vadd.f32 %v969, %v1097
    %v1099 = vpop.f32.mrf.mxu0
    %1100 = vmatprep.mubr.f32.mxu0 0.0
    %1101 = vmatmul.mubr.f32.gmra.mxu0 %v945
    %v1102 = vpop.f32.mrf.mxu0
    %v1103 = vadd.f32 %v969, %v1102
    %v1104 = vpop.f32.mrf.mxu0
    %1105 = vmatprep.mubr.f32.mxu0 0.0
    %1106 = vmatmul.mubr.f32.gmra.mxu0 %v946
    %v1107 = vpop.f32.mrf.mxu0
    %v1108 = vadd.f32 %v969, %v1107
    %v1109 = vpop.f32.mrf.mxu0
    %1110 = vmatprep.mubr.f32.mxu0 0.0
    %1111 = vmatmul.mubr.f32.gmra.mxu0 %v947
    %v1112 = vpop.f32.mrf.mxu0
    %v1113 = vadd.f32 %v969, %v1112
    %v1114 = vpop.f32.mrf.mxu0
    %1115 = vdwg.mxu0
    %v1116 = vmax.f32 %v1038, 0.0
    %v1117 = vmax.f32 %v1043, 0.0
    %v1118 = vmax.f32 %v1048, 0.0
    %v1119 = vmax.f32 %v1053, 0.0
    %v1120 = vmax.f32 %v1058, 0.0
    %v1121 = vmax.f32 %v1063, 0.0
    %v1122 = vmax.f32 %v1068, 0.0
    %v1123 = vmax.f32 %v1073, 0.0
    %v1124 = vmax.f32 %v1078, 0.0
    %v1125 = vmax.f32 %v1083, 0.0
    %v1126 = vmax.f32 %v1088, 0.0
    %v1127 = vmax.f32 %v1093, 0.0
    %v1128 = vmax.f32 %v1098, 0.0
    %v1129 = vmax.f32 %v1103, 0.0
    %v1130 = vmax.f32 %v1108, 0.0
    %v1131 = vmax.f32 %v1113, 0.0
    %v1132 = vld [vmem:[#allocation4] sm:$0xff]
    %v1133 = vld [vmem:[#allocation4 + $0x8] sm:$0xff]
    %v1134 = vld [vmem:[#allocation4 + $0x10] sm:$0xff]
    %v1135 = vld [vmem:[#allocation4 + $0x18] sm:$0xff]
    %v1136 = vld [vmem:[#allocation4 + $0x20] sm:$0xff]
    %v1137 = vld [vmem:[#allocation4 + $0x28] sm:$0xff]
    %v1138 = vld [vmem:[#allocation4 + $0x30] sm:$0xff]
    %v1139 = vld [vmem:[#allocation4 + $0x38] sm:$0xff]
    %v1140 = vld [vmem:[#allocation4 + $0x40] sm:$0xff]
    %v1141 = vld [vmem:[#allocation4 + $0x48] sm:$0xff]
    %v1142 = vld [vmem:[#allocation4 + $0x50] sm:$0xff]
    %v1143 = vld [vmem:[#allocation4 + $0x58] sm:$0xff]
    %v1144 = vld [vmem:[#allocation4 + $0x60] sm:$0xff]
    %v1145 = vld [vmem:[#allocation4 + $0x68] sm:$0xff]
    %v1146 = vld [vmem:[#allocation4 + $0x70] sm:$0xff]
    %v1147 = vld [vmem:[#allocation4 + $0x78] sm:$0xff]
    %v1148 = vld [vmem:[%s14] sm:$0x1]
    %v1150 = vlaneseq
    %v1151 = vshrl.u32 %v1150, 7
    %v1152 = vsub.s32 0, %v1151
    %v1153 = vrot.slane %v1148, %v1152
    %1155 = vmatprep.subr.mxu0 0.0
    %1156 = vmatpush1.msra.mxu0 %v1147
    %1157 = vmatprep.subr.mxu0 0.0
    %1158 = vmatpush1.msra.mxu0 %v1146
    %1159 = vmatprep.subr.mxu0 0.0
    %1160 = vmatpush1.msra.mxu0 %v1145
    %1161 = vmatprep.subr.mxu0 0.0
    %1162 = vmatpush1.msra.mxu0 %v1144
    %1163 = vmatprep.subr.mxu0 0.0
    %1164 = vmatpush1.msra.mxu0 %v1143
    %1165 = vmatprep.subr.mxu0 0.0
    %1166 = vmatpush1.msra.mxu0 %v1142
    %1167 = vmatprep.subr.mxu0 0.0
    %1168 = vmatpush1.msra.mxu0 %v1141
    %1169 = vmatprep.subr.mxu0 0.0
    %1170 = vmatpush1.msra.mxu0 %v1140
    %1171 = vmatprep.subr.mxu0 0.0
    %1172 = vmatpush1.msra.mxu0 %v1139
    %1173 = vmatprep.subr.mxu0 0.0
    %1174 = vmatpush1.msra.mxu0 %v1138
    %1175 = vmatprep.subr.mxu0 0.0
    %1176 = vmatpush1.msra.mxu0 %v1137
    %1177 = vmatprep.subr.mxu0 0.0
    %1178 = vmatpush1.msra.mxu0 %v1136
    %1179 = vmatprep.subr.mxu0 0.0
    %1180 = vmatpush1.msra.mxu0 %v1135
    %1181 = vmatprep.subr.mxu0 0.0
    %1182 = vmatpush1.msra.mxu0 %v1134
    %1183 = vmatprep.subr.mxu0 0.0
    %1184 = vmatpush1.msra.mxu0 %v1133
    %1185 = vmatprep.subr.mxu0 0.0
    %1186 = vmatpush1.msra.mxu0 %v1132
    %1187 = vmatprep.subr.mxu0 0.0
    %1188 = vmatpush2.msra.mxu0 0.0
    %1189 = vmatprep.subr.mxu0 0.0
    %1190 = vmatpush2.msra.mxu0 0.0
    %1191 = vmatprep.subr.mxu0 0.0
    %1192 = vmatpush2.msra.mxu0 0.0
    %1193 = vmatprep.subr.mxu0 0.0
    %1194 = vmatpush2.msra.mxu0 0.0
    %1195 = vmatprep.subr.mxu0 0.0
    %1196 = vmatpush2.msra.mxu0 0.0
    %1197 = vmatprep.subr.mxu0 0.0
    %1198 = vmatpush2.msra.mxu0 0.0
    %1199 = vmatprep.subr.mxu0 0.0
    %1200 = vmatpush2.msra.mxu0 0.0
    %1201 = vmatprep.subr.mxu0 0.0
    %1202 = vmatpush2.msra.mxu0 0.0
    %1203 = vmatprep.subr.mxu0 0.0
    %1204 = vmatpush2.msra.mxu0 0.0
    %1205 = vmatprep.subr.mxu0 0.0
    %1206 = vmatpush2.msra.mxu0 0.0
    %1207 = vmatprep.subr.mxu0 0.0
    %1208 = vmatpush2.msra.mxu0 0.0
    %1209 = vmatprep.subr.mxu0 0.0
    %1210 = vmatpush2.msra.mxu0 0.0
    %1211 = vmatprep.subr.mxu0 0.0
    %1212 = vmatpush2.msra.mxu0 0.0
    %1213 = vmatprep.subr.mxu0 0.0
    %1214 = vmatpush2.msra.mxu0 0.0
    %1215 = vmatprep.subr.mxu0 0.0
    %1216 = vmatpush2.msra.mxu0 0.0
    %1217 = vmatprep.subr.mxu0 0.0
    %1218 = vmatpush2.msra.mxu0 0.0
    %1219 = vmatprep.mubr.f32.mxu0 0.0
    %1220 = vmatmul.mubr.f32.gmra.mxu0 %v1116
    %v1221 = vpop.f32.mrf.mxu0
    %v1222 = vadd.f32 %v1153, %v1221
    %v1223 = vpop.f32.mrf.mxu0
    %1224 = vmatprep.mubr.f32.mxu0 0.0
    %1225 = vmatmul.mubr.f32.gmra.mxu0 %v1117
    %v1226 = vpop.f32.mrf.mxu0
    %v1227 = vadd.f32 %v1153, %v1226
    %v1228 = vpop.f32.mrf.mxu0
    %1229 = vmatprep.mubr.f32.mxu0 0.0
    %1230 = vmatmul.mubr.f32.gmra.mxu0 %v1118
    %v1231 = vpop.f32.mrf.mxu0
    %v1232 = vadd.f32 %v1153, %v1231
    %v1233 = vpop.f32.mrf.mxu0
    %1234 = vmatprep.mubr.f32.mxu0 0.0
    %1235 = vmatmul.mubr.f32.gmra.mxu0 %v1119
    %v1236 = vpop.f32.mrf.mxu0
    %v1237 = vadd.f32 %v1153, %v1236
    %v1238 = vpop.f32.mrf.mxu0
    %1239 = vmatprep.mubr.f32.mxu0 0.0
    %1240 = vmatmul.mubr.f32.gmra.mxu0 %v1120
    %v1241 = vpop.f32.mrf.mxu0
    %v1242 = vadd.f32 %v1153, %v1241
    %v1243 = vpop.f32.mrf.mxu0
    %1244 = vmatprep.mubr.f32.mxu0 0.0
    %1245 = vmatmul.mubr.f32.gmra.mxu0 %v1121
    %v1246 = vpop.f32.mrf.mxu0
    %v1247 = vadd.f32 %v1153, %v1246
    %v1248 = vpop.f32.mrf.mxu0
    %1249 = vmatprep.mubr.f32.mxu0 0.0
    %1250 = vmatmul.mubr.f32.gmra.mxu0 %v1122
    %v1251 = vpop.f32.mrf.mxu0
    %v1252 = vadd.f32 %v1153, %v1251
    %v1253 = vpop.f32.mrf.mxu0
    %1254 = vmatprep.mubr.f32.mxu0 0.0
    %1255 = vmatmul.mubr.f32.gmra.mxu0 %v1123
    %v1256 = vpop.f32.mrf.mxu0
    %v1257 = vadd.f32 %v1153, %v1256
    %v1258 = vpop.f32.mrf.mxu0
    %1259 = vmatprep.mubr.f32.mxu0 0.0
    %1260 = vmatmul.mubr.f32.gmra.mxu0 %v1124
    %v1261 = vpop.f32.mrf.mxu0
    %v1262 = vadd.f32 %v1153, %v1261
    %v1263 = vpop.f32.mrf.mxu0
    %1264 = vmatprep.mubr.f32.mxu0 0.0
    %1265 = vmatmul.mubr.f32.gmra.mxu0 %v1125
    %v1266 = vpop.f32.mrf.mxu0
    %v1267 = vadd.f32 %v1153, %v1266
    %v1268 = vpop.f32.mrf.mxu0
    %1269 = vmatprep.mubr.f32.mxu0 0.0
    %1270 = vmatmul.mubr.f32.gmra.mxu0 %v1126
    %v1271 = vpop.f32.mrf.mxu0
    %v1272 = vadd.f32 %v1153, %v1271
    %v1273 = vpop.f32.mrf.mxu0
    %1274 = vmatprep.mubr.f32.mxu0 0.0
    %1275 = vmatmul.mubr.f32.gmra.mxu0 %v1127
    %v1276 = vpop.f32.mrf.mxu0
    %v1277 = vadd.f32 %v1153, %v1276
    %v1278 = vpop.f32.mrf.mxu0
    %1279 = vmatprep.mubr.f32.mxu0 0.0
    %1280 = vmatmul.mubr.f32.gmra.mxu0 %v1128
    %v1281 = vpop.f32.mrf.mxu0
    %v1282 = vadd.f32 %v1153, %v1281
    %v1283 = vpop.f32.mrf.mxu0
    %1284 = vmatprep.mubr.f32.mxu0 0.0
    %1285 = vmatmul.mubr.f32.gmra.mxu0 %v1129
    %v1286 = vpop.f32.mrf.mxu0
    %v1287 = vadd.f32 %v1153, %v1286
    %v1288 = vpop.f32.mrf.mxu0
    %1289 = vmatprep.mubr.f32.mxu0 0.0
    %1290 = vmatmul.mubr.f32.gmra.mxu0 %v1130
    %v1291 = vpop.f32.mrf.mxu0
    %v1292 = vadd.f32 %v1153, %v1291
    %v1293 = vpop.f32.mrf.mxu0
    %1294 = vmatprep.mubr.f32.mxu0 0.0
    %1295 = vmatmul.mubr.f32.gmra.mxu0 %v1131
    %v1296 = vpop.f32.mrf.mxu0
    %v1297 = vadd.f32 %v1153, %v1296
    %v1298 = vpop.f32.mrf.mxu0
    %1299 = vdwg.mxu0
    %v1300 = vsub.f32 0.0, %v1222
    %v1301 = vsub.f32 0.0, %v1227
    %v1302 = vsub.f32 0.0, %v1232
    %v1303 = vsub.f32 0.0, %v1237
    %v1304 = vsub.f32 0.0, %v1242
    %v1305 = vsub.f32 0.0, %v1247
    %v1306 = vsub.f32 0.0, %v1252
    %v1307 = vsub.f32 0.0, %v1257
    %v1308 = vsub.f32 0.0, %v1262
    %v1309 = vsub.f32 0.0, %v1267
    %v1310 = vsub.f32 0.0, %v1272
    %v1311 = vsub.f32 0.0, %v1277
    %v1312 = vsub.f32 0.0, %v1282
    %v1313 = vsub.f32 0.0, %v1287
    %v1314 = vsub.f32 0.0, %v1292
    %v1315 = vsub.f32 0.0, %v1297
    %v1316 = vmul.f32 %v1300, 1.442695
    %v1317 = vpow.pop %v1316
    %v1318 = vmul.f32 %v1301, 1.442695
    %v1319 = vpow.pop %v1318
    %v1320 = vmul.f32 %v1302, 1.442695
    %v1321 = vpow.pop %v1320
    %v1322 = vmul.f32 %v1303, 1.442695
    %v1323 = vpow.pop %v1322
    %v1324 = vmul.f32 %v1304, 1.442695
    %v1325 = vpow.pop %v1324
    %v1326 = vmul.f32 %v1305, 1.442695
    %v1327 = vpow.pop %v1326
    %v1328 = vmul.f32 %v1306, 1.442695
    %v1329 = vpow.pop %v1328
    %v1330 = vmul.f32 %v1307, 1.442695
    %v1331 = vpow.pop %v1330
    %v1332 = vmul.f32 %v1308, 1.442695
    %v1333 = vpow.pop %v1332
    %v1334 = vmul.f32 %v1309, 1.442695
    %v1335 = vpow.pop %v1334
    %v1336 = vmul.f32 %v1310, 1.442695
    %v1337 = vpow.pop %v1336
    %v1338 = vmul.f32 %v1311, 1.442695
    %v1339 = vpow.pop %v1338
    %v1340 = vmul.f32 %v1312, 1.442695
    %v1341 = vpow.pop %v1340
    %v1342 = vmul.f32 %v1313, 1.442695
    %v1343 = vpow.pop %v1342
    %v1344 = vmul.f32 %v1314, 1.442695
    %v1345 = vpow.pop %v1344
    %v1346 = vmul.f32 %v1315, 1.442695
    %v1347 = vpow.pop %v1346
    %v1348 = vadd.f32 %v1317, 1.0
    %v1349 = vadd.f32 %v1319, 1.0
    %v1350 = vadd.f32 %v1321, 1.0
    %v1351 = vadd.f32 %v1323, 1.0
    %v1352 = vadd.f32 %v1325, 1.0
    %v1353 = vadd.f32 %v1327, 1.0
    %v1354 = vadd.f32 %v1329, 1.0
    %v1355 = vadd.f32 %v1331, 1.0
    %v1356 = vadd.f32 %v1333, 1.0
    %v1357 = vadd.f32 %v1335, 1.0
    %v1358 = vadd.f32 %v1337, 1.0
    %v1359 = vadd.f32 %v1339, 1.0
    %v1360 = vadd.f32 %v1341, 1.0
    %v1361 = vadd.f32 %v1343, 1.0
    %v1362 = vadd.f32 %v1345, 1.0
    %v1363 = vadd.f32 %v1347, 1.0
    %v1364 = vrcp.pop %v1348
    %v1365 = vrcp.pop %v1349
    %v1366 = vrcp.pop %v1350
    %v1367 = vrcp.pop %v1351
    %v1368 = vrcp.pop %v1352
    %v1369 = vrcp.pop %v1353
    %v1370 = vrcp.pop %v1354
    %v1371 = vrcp.pop %v1355
    %v1372 = vrcp.pop %v1356
    %v1373 = vrcp.pop %v1357
    %v1374 = vrcp.pop %v1358
    %v1375 = vrcp.pop %v1359
    %v1376 = vrcp.pop %v1360
    %v1377 = vrcp.pop %v1361
    %v1378 = vrcp.pop %v1362
    %v1379 = vrcp.pop %v1363
    %1380 = vst [vmem:[%s15] sm:$0xff] %v1364
    %1381 = vst [vmem:[%s15 + $0x8] sm:$0xff] %v1365
    %1382 = vst [vmem:[%s15 + $0x10] sm:$0xff] %v1366
    %1383 = vst [vmem:[%s15 + $0x18] sm:$0xff] %v1367
    %1384 = vst [vmem:[%s15 + $0x20] sm:$0xff] %v1368
    %1385 = vst [vmem:[%s15 + $0x28] sm:$0xff] %v1369
    %1386 = vst [vmem:[%s15 + $0x30] sm:$0xff] %v1370
    %1387 = vst [vmem:[%s15 + $0x38] sm:$0xff] %v1371
    %1388 = vst [vmem:[%s15 + $0x40] sm:$0xff] %v1372
    %1389 = vst [vmem:[%s15 + $0x48] sm:$0xff] %v1373
    %1390 = vst [vmem:[%s15 + $0x50] sm:$0xff] %v1374
    %1391 = vst [vmem:[%s15 + $0x58] sm:$0xff] %v1375
    %1392 = vst [vmem:[%s15 + $0x60] sm:$0xff] %v1376
    %1393 = vst [vmem:[%s15 + $0x68] sm:$0xff] %v1377
    %1394 = vst [vmem:[%s15 + $0x70] sm:$0xff] %v1378
    %1395 = vst [vmem:[%s15 + $0x78] sm:$0xff] %v1379
    // Predicated region
    $region70: #{generator_forward.1} parent=1 // pred_check
      _
    $region71: #{generator_forward.1} parent=1 // pred_check_branch
      %1397 = sbr.rel (0) target = $region73
    $region72: #{generator_forward.1} parent=1 // pred_region
      _
    $region73: #{generator_forward.1} parent=1 // pred_fallthru
      _
    // Predicated region
    $region74: #{generator_forward.1} parent=1 // pred_check
      _
    $region75: #{generator_forward.1} parent=1 // pred_check_branch
      %1399 = sbr.rel (0) target = $region77
    $region76: #{generator_forward.1} parent=1 // pred_region
      _
    $region77: #{generator_forward.1} parent=1 // pred_fallthru
      _
    %1400 = vsyncpa [#allocation3], 1
    %1401 = vsyncpa [#allocation5], 1

</llo_original>
